<compile_context>
chip_gen: v5e
topology: v5e:2x2
jax: 0.10.0
libtpu: 0.0.40
codegen_flags: <defaults>
</compile_context>

<pallas_src>
import functools

import jax
import jax.numpy as jnp
import numpy as np
from jax.experimental import pallas as pl
from jax.experimental.pallas import tpu as pltpu

HID_DIM = 16               # "hid_dim" argument of the PyTorch Decoder
DEC_HID = 2 * HID_DIM      # GRU hidden size (self.hid_dim = hid_dim * 2)
EMB_DIM = 32
VOCAB = 64
N_LAYERS = 2
BATCH = 8                  # full sublane -> unmasked vector loads/stores
SRC_LEN = 8
ISATT = True               # fused kernel implements the isatt=True path (as tested)


# ---------------------------------------------------------------- fused kernel

def _decoder_fused_kernel(tokens_ref, *refs, n_layers, hid):
    # tokens_ref: SMEM (B,) int32 (scalar prefetch)
    (emb_tbl_ref, enc_ref, hid_ref,
     attn_whT_ref, attn_weT_ref, attn_b_ref, attn_v_ref) = refs[:7]
    gru_refs = refs[7:7 + 4 * n_layers]
    (w1_ref, b1_ref, w2_ref, b2_ref, w3_ref, b3_ref) = refs[7 + 4 * n_layers:
                                                            7 + 4 * n_layers + 6]
    n_in = 7 + 4 * n_layers + 6
    pred_ref = refs[n_in]
    hnew_ref = refs[n_in + 1]
    emb_scratch = refs[n_in + 2]

    B, S, H = enc_ref.shape          # H == DEC_HID == enc_dim

    # ---- 1) embedding gather (dropout = identity, eval mode) ------------------
    for b in range(B):
        tok = tokens_ref[b]
        emb_scratch[pl.ds(b, 1), :] = emb_tbl_ref[pl.ds(tok, 1), :]
    embedded = emb_scratch[...]                                      # (B, EMB)

    # ---- 2) additive attention + context (attn weights never written back) ----
    enc = enc_ref[...]                                               # (B, S, H)
    dh = hid_ref[n_layers - 1]                                       # (B, H) top layer
    eh = jnp.dot(dh, attn_whT_ref[...], preferred_element_type=jnp.float32)
    ee = jnp.dot(enc.reshape(B * S, H), attn_weT_ref[...],
                 preferred_element_type=jnp.float32).reshape(B, S, H)
    energy = jnp.tanh(ee + eh[:, None, :] + attn_b_ref[...][None, :, :])
    scores = jnp.sum(energy * attn_v_ref[...][None, :, :], axis=-1)  # (B, S)
    m = jnp.max(scores, axis=1, keepdims=True)
    e = jnp.exp(scores - m)
    attn = e / jnp.sum(e, axis=1, keepdims=True)
    ctx = jnp.sum(attn[:, :, None] * enc, axis=1)                    # (B, H)

    # ---- 3) GRU stack (PyTorch gate order r, z, n) -----------------------------
    x = jnp.concatenate([embedded, ctx], axis=-1)                    # (B, EMB + H)
    for l in range(n_layers):
        w_ref, b_ref, whhn_ref, bhhn_ref = gru_refs[4 * l:4 * l + 4]
        h_prev = hid_ref[l]                                          # (B, H)
        xh = jnp.concatenate([x, h_prev], axis=-1)
        # fused gate matmul: [x, h] @ [Wih; Whh]  (gives gi + gh for r,z,n)
        comb = jnp.dot(xh, w_ref[...], preferred_element_type=jnp.float32) + b_ref[...]
        # n-gate needs gh_n separately (it is scaled by r)
        ghn = jnp.dot(h_prev, whhn_ref[...],
                      preferred_element_type=jnp.float32) + bhhn_ref[...]
        r = jax.nn.sigmoid(comb[:, :hid])
        z = jax.nn.sigmoid(comb[:, hid:2 * hid])
        n = jnp.tanh(comb[:, 2 * hid:] + (r - 1.0) * ghn)            # = gi_n + r*gh_n
        h_new = (1.0 - z) * n + z * h_prev
        hnew_ref[l] = h_new
        x = h_new                                                    # inter-layer dropout: identity

    # ---- 4) vocab projection MLP (no activations) ------------------------------
    t = jnp.dot(x, w1_ref[...], preferred_element_type=jnp.float32) + b1_ref[...]
    t = jnp.dot(t, w2_ref[...], preferred_element_type=jnp.float32) + b2_ref[...]
    pred_ref[...] = jnp.dot(t, w3_ref[...], preferred_element_type=jnp.float32) + b3_ref[...]


# ---------------------------------------------------------------- parameters

def init_params(key):
    ks = jax.random.split(key, 16)

    def w(k, shape, scale=0.1):
        return scale * jax.random.normal(k, shape, dtype=jnp.float32)

    p = {}
    p['embedding'] = w(ks[0], (VOCAB, EMB_DIM))

    # Attention.attn : nn.Linear(4*hid_dim, 2*hid_dim) -> weight (2H, 4H); split over input cols
    attn_w = w(ks[1], (DEC_HID, 2 * DEC_HID))
    p['attn_whT'] = jnp.transpose(attn_w[:, :DEC_HID])   # multiplies decoder hidden  (2H, 2H)
    p['attn_weT'] = jnp.transpose(attn_w[:, DEC_HID:])   # multiplies encoder outputs (2H, 2H)
    p['attn_b'] = w(ks[2], (1, DEC_HID))
    p['attn_v'] = w(ks[3], (1, DEC_HID))                 # Attention.v : Linear(2H, 1, bias=False)

    # GRU layers (PyTorch gate order: r, z, n)
    in_dim = EMB_DIM + DEC_HID if ISATT else EMB_DIM
    p['gru'] = []
    for l in range(N_LAYERS):
        k0, k1, k2, k3 = jax.random.split(ks[4 + l], 4)
        layer_in = in_dim if l == 0 else DEC_HID
        p['gru'].append(dict(
            wihT=jnp.transpose(w(k0, (3 * DEC_HID, layer_in))),   # (layer_in, 3*2H)
            whhT=jnp.transpose(w(k1, (3 * DEC_HID, DEC_HID))),    # (2H, 3*2H)
            bih=w(k2, (1, 3 * DEC_HID)),
            bhh=w(k3, (1, 3 * DEC_HID)),
        ))

    # embedding2vocab1/2/3
    p['w1T'] = jnp.transpose(w(ks[8], (2 * DEC_HID, DEC_HID)))        # 2H -> 4H
    p['b1'] = w(ks[9], (1, 2 * DEC_HID))
    p['w2T'] = jnp.transpose(w(ks[10], (4 * DEC_HID, 2 * DEC_HID)))   # 4H -> 8H
    p['b2'] = w(ks[11], (1, 4 * DEC_HID))
    p['w3T'] = jnp.transpose(w(ks[12], (VOCAB, 4 * DEC_HID)))         # 8H -> vocab
    p['b3'] = w(ks[13], (1, VOCAB))
    return p


def prepare_fused(p):
    """Derive kernel-friendly (pre-stacked) weights from the PyTorch-layout params."""
    fused = {
        'embedding': p['embedding'],
        'attn_whT': p['attn_whT'], 'attn_weT': p['attn_weT'],
        'attn_b': p['attn_b'], 'attn_v': p['attn_v'],
        'gru': [],
        'w1T': p['w1T'], 'b1': p['b1'], 'w2T': p['w2T'], 'b2': p['b2'],
        'w3T': p['w3T'], 'b3': p['b3'],
    }
    for g in p['gru']:
        fused['gru'].append(dict(
            w=jnp.concatenate([g['wihT'], g['whhT']], axis=0),   # (in+hid, 3*hid)
            b=g['bih'] + g['bhh'],                               # (1, 3*hid)
            whhTn=g['whhT'][:, 2 * DEC_HID:],                    # (hid, hid)
            bhhn=g['bhh'][:, 2 * DEC_HID:],                      # (1, hid)
        ))
    return fused


# ---------------------------------------------------------------- forward (Pallas)

def decoder_forward(fused, tokens, hidden, encoder_outputs):
    B, S, _ = encoder_outputs.shape

    in_arrays = [fused['embedding'], encoder_outputs, hidden,
                 fused['attn_whT'], fused['attn_weT'], fused['attn_b'], fused['attn_v']]
    for g in fused['gru']:
        in_arrays += [g['w'], g['b'], g['whhTn'], g['bhhn']]
    in_arrays += [fused['w1T'], fused['b1'], fused['w2T'], fused['b2'],
                  fused['w3T'], fused['b3']]

    out_shapes = (jax.ShapeDtypeStruct((B, VOCAB), jnp.float32),
                  jax.ShapeDtypeStruct((N_LAYERS, B, DEC_HID), jnp.float32))

    def _spec(shape):
        nd = len(shape)
        # index_map receives (grid idx, tokens_prefetch_ref)
        return pl.BlockSpec(shape, lambda i, tok, _n=nd: (0,) * _n)

    grid_spec = pltpu.PrefetchScalarGridSpec(
        num_scalar_prefetch=1,
        grid=(1,),
        in_specs=[_spec(a.shape) for a in in_arrays],
        out_specs=tuple(_spec(s.shape) for s in out_shapes),
        scratch_shapes=[pltpu.VMEM((B, EMB_DIM), jnp.float32)],
    )

    kernel = functools.partial(_decoder_fused_kernel, n_layers=N_LAYERS, hid=DEC_HID)

    prediction, hidden_new = pl.pallas_call(
        kernel,
        grid_spec=grid_spec,
        out_shape=out_shapes,
        compiler_params=pltpu.CompilerParams(dimension_semantics=("arbitrary",)),
    )(tokens.astype(jnp.int32), *in_arrays)
    return prediction, hidden_new


# ---------------------------------------------------------------- plain-JAX reference

def decoder_forward_ref(params, tokens, hidden, encoder_outputs):
    emb = params['embedding'][tokens]
    dh = hidden[-1]
    eh = dh @ params['attn_whT']
    ee = jnp.einsum('bsd,de->bse', encoder_outputs, params['attn_weT'])
    energy = jnp.tanh(ee + eh[:, None, :] + params['attn_b'][None, :, :])
    scores = jnp.sum(energy * params['attn_v'][None, :, :], axis=-1)
    attn = jax.nn.softmax(scores, axis=1)
    ctx = jnp.einsum('bs,bsd->bd', attn, encoder_outputs)
    x = jnp.concatenate([emb, ctx], axis=-1)
    new_h = []
    layer_in = x
    H = DEC_HID
    for l in range(N_LAYERS):
        g = params['gru'][l]
        gi = layer_in @ g['wihT'] + g['bih']
        gh = hidden[l] @ g['whhT'] + g['bhh']
        r = jax.nn.sigmoid(gi[:, :H] + gh[:, :H])
        z = jax.nn.sigmoid(gi[:, H:2 * H] + gh[:, H:2 * H])
        n = jnp.tanh(gi[:, 2 * H:] + r * gh[:, 2 * H:])
        h_new = (1.0 - z) * n + z * hidden[l]
        new_h.append(h_new)
        layer_in = h_new
    h1 = layer_in @ params['w1T'] + params['b1']
    h2 = h1 @ params['w2T'] + params['b2']
    pred = h2 @ params['w3T'] + params['b3']
    return pred, jnp.stack(new_h, axis=0)


# ---------------------------------------------------------------- main

if __name__ == "__main__":
    key = jax.random.PRNGKey(0)
    kp, kt, kh, ke = jax.random.split(key, 4)
    params = init_params(kp)
    fused = prepare_fused(params)

    tokens = jax.random.randint(kt, (BATCH,), 0, VOCAB)                          # (B,) int32
    hidden = 0.1 * jax.random.normal(kh, (N_LAYERS, BATCH, DEC_HID), jnp.float32)
    encoder_outputs = 0.1 * jax.random.normal(ke, (BATCH, SRC_LEN, DEC_HID), jnp.float32)

    prediction, hidden_new = decoder_forward(fused, tokens, hidden, encoder_outputs)
    jax.block_until_ready((prediction, hidden_new))

    pred_ref, hid_ref = decoder_forward_ref(params, tokens, hidden, encoder_outputs)
    np.testing.assert_allclose(np.asarray(prediction), np.asarray(pred_ref), rtol=1e-4, atol=1e-4)
    np.testing.assert_allclose(np.asarray(hidden_new), np.asarray(hid_ref), rtol=1e-4, atol=1e-4)

    assert prediction.shape == (BATCH, VOCAB)
    assert hidden_new.shape == (N_LAYERS, BATCH, DEC_HID)
    print("KERNEL_OK")
</pallas_src>

<mosaic_0001>
module attributes {stable_mosaic.version = 11 : i64} {
  func.func @_decoder_fused_kernel(%arg0: i32, %arg1: memref<8xi32, #tpu.memory_space<smem>>, %arg2: memref<64x32xf32, #tpu.memory_space<vmem>>, %arg3: memref<8x8x32xf32, #tpu.memory_space<vmem>>, %arg4: memref<2x8x32xf32, #tpu.memory_space<vmem>>, %arg5: memref<32x32xf32, #tpu.memory_space<vmem>>, %arg6: memref<32x32xf32, #tpu.memory_space<vmem>>, %arg7: memref<1x32xf32, #tpu.memory_space<vmem>>, %arg8: memref<1x32xf32, #tpu.memory_space<vmem>>, %arg9: memref<96x96xf32, #tpu.memory_space<vmem>>, %arg10: memref<1x96xf32, #tpu.memory_space<vmem>>, %arg11: memref<32x32xf32, #tpu.memory_space<vmem>>, %arg12: memref<1x32xf32, #tpu.memory_space<vmem>>, %arg13: memref<64x96xf32, #tpu.memory_space<vmem>>, %arg14: memref<1x96xf32, #tpu.memory_space<vmem>>, %arg15: memref<32x32xf32, #tpu.memory_space<vmem>>, %arg16: memref<1x32xf32, #tpu.memory_space<vmem>>, %arg17: memref<32x64xf32, #tpu.memory_space<vmem>>, %arg18: memref<1x64xf32, #tpu.memory_space<vmem>>, %arg19: memref<64x128xf32, #tpu.memory_space<vmem>>, %arg20: memref<1x128xf32, #tpu.memory_space<vmem>>, %arg21: memref<128x64xf32, #tpu.memory_space<vmem>>, %arg22: memref<1x64xf32, #tpu.memory_space<vmem>>, %arg23: memref<8x64xf32, #tpu.memory_space<vmem>>, %arg24: memref<2x8x32xf32, #tpu.memory_space<vmem>>, %arg25: memref<8x32xf32, #tpu.memory_space<vmem>>) attributes {dimension_semantics = [#tpu.dimension_semantics<arbitrary>], iteration_bounds = array<i64: 1>, scalar_prefetch = 1 : i64, scratch_operands = 1 : i64, tpu.core_type = #tpu.core_type<tc>, window_params = [{pipeline_mode = #tpu.pipeline_mode<synchronous>, transform_indices = @transform_0, window_bounds = array<i64: 64, 32>}, {pipeline_mode = #tpu.pipeline_mode<synchronous>, transform_indices = @transform_1, window_bounds = array<i64: 8, 8, 32>}, {pipeline_mode = #tpu.pipeline_mode<synchronous>, transform_indices = @transform_2, window_bounds = array<i64: 2, 8, 32>}, {pipeline_mode = #tpu.pipeline_mode<synchronous>, transform_indices = @transform_3, window_bounds = array<i64: 32, 32>}, {pipeline_mode = #tpu.pipeline_mode<synchronous>, transform_indices = @transform_4, window_bounds = array<i64: 32, 32>}, {pipeline_mode = #tpu.pipeline_mode<synchronous>, transform_indices = @transform_5, window_bounds = array<i64: 1, 32>}, {pipeline_mode = #tpu.pipeline_mode<synchronous>, transform_indices = @transform_6, window_bounds = array<i64: 1, 32>}, {pipeline_mode = #tpu.pipeline_mode<synchronous>, transform_indices = @transform_7, window_bounds = array<i64: 96, 96>}, {pipeline_mode = #tpu.pipeline_mode<synchronous>, transform_indices = @transform_8, window_bounds = array<i64: 1, 96>}, {pipeline_mode = #tpu.pipeline_mode<synchronous>, transform_indices = @transform_9, window_bounds = array<i64: 32, 32>}, {pipeline_mode = #tpu.pipeline_mode<synchronous>, transform_indices = @transform_10, window_bounds = array<i64: 1, 32>}, {pipeline_mode = #tpu.pipeline_mode<synchronous>, transform_indices = @transform_11, window_bounds = array<i64: 64, 96>}, {pipeline_mode = #tpu.pipeline_mode<synchronous>, transform_indices = @transform_12, window_bounds = array<i64: 1, 96>}, {pipeline_mode = #tpu.pipeline_mode<synchronous>, transform_indices = @transform_13, window_bounds = array<i64: 32, 32>}, {pipeline_mode = #tpu.pipeline_mode<synchronous>, transform_indices = @transform_14, window_bounds = array<i64: 1, 32>}, {pipeline_mode = #tpu.pipeline_mode<synchronous>, transform_indices = @transform_15, window_bounds = array<i64: 32, 64>}, {pipeline_mode = #tpu.pipeline_mode<synchronous>, transform_indices = @transform_16, window_bounds = array<i64: 1, 64>}, {pipeline_mode = #tpu.pipeline_mode<synchronous>, transform_indices = @transform_17, window_bounds = array<i64: 64, 128>}, {pipeline_mode = #tpu.pipeline_mode<synchronous>, transform_indices = @transform_18, window_bounds = array<i64: 1, 128>}, {pipeline_mode = #tpu.pipeline_mode<synchronous>, transform_indices = @transform_19, window_bounds = array<i64: 128, 64>}, {pipeline_mode = #tpu.pipeline_mode<synchronous>, transform_indices = @transform_20, window_bounds = array<i64: 1, 64>}, {pipeline_mode = #tpu.pipeline_mode<synchronous>, transform_indices = @transform_21, window_bounds = array<i64: 8, 64>}, {pipeline_mode = #tpu.pipeline_mode<synchronous>, transform_indices = @transform_22, window_bounds = array<i64: 2, 8, 32>}]} {
    %c0 = arith.constant 0 : index
    %0 = memref.load %arg1[%c0] : memref<8xi32, #tpu.memory_space<smem>>
    %1 = arith.index_cast %0 : i32 to index
    %c0_0 = arith.constant 0 : index
    %2 = vector.load %arg2[%1, %c0_0] : memref<64x32xf32, #tpu.memory_space<vmem>>, vector<1x32xf32>
    %c0_1 = arith.constant 0 : index
    %c0_2 = arith.constant 0 : index
    %3 = vector.load %arg25[%c0_1, %c0_2] : memref<8x32xf32, #tpu.memory_space<vmem>>, vector<1x32xf32>
    tpu.vector_store %arg25[%c0_1, %c0_2], %2 {strides = array<i32>} : memref<8x32xf32, #tpu.memory_space<vmem>>, vector<1x32xf32>,
    %c1 = arith.constant 1 : index
    %4 = memref.load %arg1[%c1] : memref<8xi32, #tpu.memory_space<smem>>
    %5 = arith.index_cast %4 : i32 to index
    %c0_3 = arith.constant 0 : index
    %6 = vector.load %arg2[%5, %c0_3] : memref<64x32xf32, #tpu.memory_space<vmem>>, vector<1x32xf32>
    %c1_4 = arith.constant 1 : index
    %c0_5 = arith.constant 0 : index
    %7 = vector.load %arg25[%c1_4, %c0_5] : memref<8x32xf32, #tpu.memory_space<vmem>>, vector<1x32xf32>
    tpu.vector_store %arg25[%c1_4, %c0_5], %6 {strides = array<i32>} : memref<8x32xf32, #tpu.memory_space<vmem>>, vector<1x32xf32>,
    %c2 = arith.constant 2 : index
    %8 = memref.load %arg1[%c2] : memref<8xi32, #tpu.memory_space<smem>>
    %9 = arith.index_cast %8 : i32 to index
    %c0_6 = arith.constant 0 : index
    %10 = vector.load %arg2[%9, %c0_6] : memref<64x32xf32, #tpu.memory_space<vmem>>, vector<1x32xf32>
    %c2_7 = arith.constant 2 : index
    %c0_8 = arith.constant 0 : index
    %11 = vector.load %arg25[%c2_7, %c0_8] : memref<8x32xf32, #tpu.memory_space<vmem>>, vector<1x32xf32>
    tpu.vector_store %arg25[%c2_7, %c0_8], %10 {strides = array<i32>} : memref<8x32xf32, #tpu.memory_space<vmem>>, vector<1x32xf32>,
    %c3 = arith.constant 3 : index
    %12 = memref.load %arg1[%c3] : memref<8xi32, #tpu.memory_space<smem>>
    %13 = arith.index_cast %12 : i32 to index
    %c0_9 = arith.constant 0 : index
    %14 = vector.load %arg2[%13, %c0_9] : memref<64x32xf32, #tpu.memory_space<vmem>>, vector<1x32xf32>
    %c3_10 = arith.constant 3 : index
    %c0_11 = arith.constant 0 : index
    %15 = vector.load %arg25[%c3_10, %c0_11] : memref<8x32xf32, #tpu.memory_space<vmem>>, vector<1x32xf32>
    tpu.vector_store %arg25[%c3_10, %c0_11], %14 {strides = array<i32>} : memref<8x32xf32, #tpu.memory_space<vmem>>, vector<1x32xf32>,
    %c4 = arith.constant 4 : index
    %16 = memref.load %arg1[%c4] : memref<8xi32, #tpu.memory_space<smem>>
    %17 = arith.index_cast %16 : i32 to index
    %c0_12 = arith.constant 0 : index
    %18 = vector.load %arg2[%17, %c0_12] : memref<64x32xf32, #tpu.memory_space<vmem>>, vector<1x32xf32>
    %c4_13 = arith.constant 4 : index
    %c0_14 = arith.constant 0 : index
    %19 = vector.load %arg25[%c4_13, %c0_14] : memref<8x32xf32, #tpu.memory_space<vmem>>, vector<1x32xf32>
    tpu.vector_store %arg25[%c4_13, %c0_14], %18 {strides = array<i32>} : memref<8x32xf32, #tpu.memory_space<vmem>>, vector<1x32xf32>,
    %c5 = arith.constant 5 : index
    %20 = memref.load %arg1[%c5] : memref<8xi32, #tpu.memory_space<smem>>
    %21 = arith.index_cast %20 : i32 to index
    %c0_15 = arith.constant 0 : index
    %22 = vector.load %arg2[%21, %c0_15] : memref<64x32xf32, #tpu.memory_space<vmem>>, vector<1x32xf32>
    %c5_16 = arith.constant 5 : index
    %c0_17 = arith.constant 0 : index
    %23 = vector.load %arg25[%c5_16, %c0_17] : memref<8x32xf32, #tpu.memory_space<vmem>>, vector<1x32xf32>
    tpu.vector_store %arg25[%c5_16, %c0_17], %22 {strides = array<i32>} : memref<8x32xf32, #tpu.memory_space<vmem>>, vector<1x32xf32>,
    %c6 = arith.constant 6 : index
    %24 = memref.load %arg1[%c6] : memref<8xi32, #tpu.memory_space<smem>>
    %25 = arith.index_cast %24 : i32 to index
    %c0_18 = arith.constant 0 : index
    %26 = vector.load %arg2[%25, %c0_18] : memref<64x32xf32, #tpu.memory_space<vmem>>, vector<1x32xf32>
    %c6_19 = arith.constant 6 : index
    %c0_20 = arith.constant 0 : index
    %27 = vector.load %arg25[%c6_19, %c0_20] : memref<8x32xf32, #tpu.memory_space<vmem>>, vector<1x32xf32>
    tpu.vector_store %arg25[%c6_19, %c0_20], %26 {strides = array<i32>} : memref<8x32xf32, #tpu.memory_space<vmem>>, vector<1x32xf32>,
    %c7 = arith.constant 7 : index
    %28 = memref.load %arg1[%c7] : memref<8xi32, #tpu.memory_space<smem>>
    %29 = arith.index_cast %28 : i32 to index
    %c0_21 = arith.constant 0 : index
    %30 = vector.load %arg2[%29, %c0_21] : memref<64x32xf32, #tpu.memory_space<vmem>>, vector<1x32xf32>
    %c7_22 = arith.constant 7 : index
    %c0_23 = arith.constant 0 : index
    %31 = vector.load %arg25[%c7_22, %c0_23] : memref<8x32xf32, #tpu.memory_space<vmem>>, vector<1x32xf32>
    tpu.vector_store %arg25[%c7_22, %c0_23], %30 {strides = array<i32>} : memref<8x32xf32, #tpu.memory_space<vmem>>, vector<1x32xf32>,
    %c0_24 = arith.constant 0 : index
    %c0_25 = arith.constant 0 : index
    %32 = vector.load %arg25[%c0_24, %c0_25] : memref<8x32xf32, #tpu.memory_space<vmem>>, vector<8x32xf32>
    %c0_26 = arith.constant 0 : index
    %c0_27 = arith.constant 0 : index
    %c0_28 = arith.constant 0 : index
    %33 = vector.load %arg3[%c0_26, %c0_27, %c0_28] : memref<8x8x32xf32, #tpu.memory_space<vmem>>, vector<8x8x32xf32>
    %c1_29 = arith.constant 1 : index
    %c0_30 = arith.constant 0 : index
    %c0_31 = arith.constant 0 : index
    %34 = vector.load %arg4[%c1_29, %c0_30, %c0_31] : memref<2x8x32xf32, #tpu.memory_space<vmem>>, vector<1x8x32xf32>
    %35 = vector.shape_cast %34 : vector<1x8x32xf32> to vector<8x32xf32>
    %c0_32 = arith.constant 0 : index
    %c0_33 = arith.constant 0 : index
    %36 = vector.load %arg5[%c0_32, %c0_33] : memref<32x32xf32, #tpu.memory_space<vmem>>, vector<32x32xf32>
    %cst = arith.constant dense<0.000000e+00> : vector<8x32xf32>
    %37 = tpu.matmul %35, %36, %cst {dimension_numbers = #tpu.dot_dimension_numbers<[1], [0], [0], [1], [0, 0, 1, 1], [], []>} : vector<8x32xf32>, vector<32x32xf32>, vector<8x32xf32> -> vector<8x32xf32>
    %38 = vector.shape_cast %33 : vector<8x8x32xf32> to vector<64x32xf32>
    %c0_34 = arith.constant 0 : index
    %c0_35 = arith.constant 0 : index
    %39 = vector.load %arg6[%c0_34, %c0_35] : memref<32x32xf32, #tpu.memory_space<vmem>>, vector<32x32xf32>
    %cst_36 = arith.constant dense<0.000000e+00> : vector<64x32xf32>
    %40 = tpu.matmul %38, %39, %cst_36 {dimension_numbers = #tpu.dot_dimension_numbers<[1], [0], [0], [1], [0, 0, 1, 1], [], []>} : vector<64x32xf32>, vector<32x32xf32>, vector<64x32xf32> -> vector<64x32xf32>
    %41 = vector.shape_cast %40 : vector<64x32xf32> to vector<8x8x32xf32>
    %42 = vector.shape_cast %37 : vector<8x32xf32> to vector<8x1x32xf32>
    %43 = vector.broadcast %42 : vector<8x1x32xf32> to vector<8x8x32xf32>
    %44 = arith.addf %41, %43 : vector<8x8x32xf32>
    %c0_37 = arith.constant 0 : index
    %c0_38 = arith.constant 0 : index
    %45 = vector.load %arg7[%c0_37, %c0_38] : memref<1x32xf32, #tpu.memory_space<vmem>>, vector<1x32xf32>
    %46 = vector.shape_cast %45 : vector<1x32xf32> to vector<1x1x32xf32>
    %47 = vector.broadcast %46 : vector<1x1x32xf32> to vector<8x8x32xf32>
    %48 = arith.addf %44, %47 : vector<8x8x32xf32>
    %49 = math.tanh %48 : vector<8x8x32xf32>
    %c0_39 = arith.constant 0 : index
    %c0_40 = arith.constant 0 : index
    %50 = vector.load %arg8[%c0_39, %c0_40] : memref<1x32xf32, #tpu.memory_space<vmem>>, vector<1x32xf32>
    %51 = vector.shape_cast %50 : vector<1x32xf32> to vector<1x1x32xf32>
    %52 = vector.broadcast %51 : vector<1x1x32xf32> to vector<8x8x32xf32>
    %53 = arith.mulf %49, %52 : vector<8x8x32xf32>
    %cst_41 = arith.constant dense<0.000000e+00> : vector<8x8xf32>
    %54 = vector.multi_reduction <add>, %53, %cst_41 [2] : vector<8x8x32xf32> to vector<8x8xf32>
    %cst_42 = arith.constant dense<0xFF800000> : vector<8xf32>
    %55 = vector.multi_reduction <maximumf>, %54, %cst_42 [1] : vector<8x8xf32> to vector<8xf32>
    %56 = vector.shape_cast %55 : vector<8xf32> to vector<8x1xf32>
    %57 = vector.broadcast %56 : vector<8x1xf32> to vector<8x8xf32>
    %58 = arith.subf %54, %57 : vector<8x8xf32>
    %59 = math.exp %58 : vector<8x8xf32>
    %cst_43 = arith.constant dense<0.000000e+00> : vector<8xf32>
    %60 = vector.multi_reduction <add>, %59, %cst_43 [1] : vector<8x8xf32> to vector<8xf32>
    %61 = vector.shape_cast %60 : vector<8xf32> to vector<8x1xf32>
    %62 = vector.broadcast %61 : vector<8x1xf32> to vector<8x8xf32>
    %63 = arith.divf %59, %62 : vector<8x8xf32>
    %64 = vector.shape_cast %63 : vector<8x8xf32> to vector<8x8x1xf32>
    %65 = vector.broadcast %64 : vector<8x8x1xf32> to vector<8x8x32xf32>
    %66 = arith.mulf %65, %33 : vector<8x8x32xf32>
    %cst_44 = arith.constant dense<0.000000e+00> : vector<8x32xf32>
    %67 = vector.multi_reduction <add>, %66, %cst_44 [1] : vector<8x8x32xf32> to vector<8x32xf32>
    %68 = tpu.concatenate %32, %67 in 1 : vector<8x32xf32>, vector<8x32xf32> -> vector<8x64xf32>
    %c0_45 = arith.constant 0 : index
    %c0_46 = arith.constant 0 : index
    %c0_47 = arith.constant 0 : index
    %69 = vector.load %arg4[%c0_45, %c0_46, %c0_47] : memref<2x8x32xf32, #tpu.memory_space<vmem>>, vector<1x8x32xf32>
    %70 = vector.shape_cast %69 : vector<1x8x32xf32> to vector<8x32xf32>
    %71 = tpu.concatenate %68, %70 in 1 : vector<8x64xf32>, vector<8x32xf32> -> vector<8x96xf32>
    %c0_48 = arith.constant 0 : index
    %c0_49 = arith.constant 0 : index
    %72 = vector.load %arg9[%c0_48, %c0_49] : memref<96x96xf32, #tpu.memory_space<vmem>>, vector<96x96xf32>
    %cst_50 = arith.constant dense<0.000000e+00> : vector<8x96xf32>
    %73 = tpu.matmul %71, %72, %cst_50 {dimension_numbers = #tpu.dot_dimension_numbers<[1], [0], [0], [1], [0, 0, 1, 1], [], []>} : vector<8x96xf32>, vector<96x96xf32>, vector<8x96xf32> -> vector<8x96xf32>
    %c0_51 = arith.constant 0 : index
    %c0_52 = arith.constant 0 : index
    %74 = vector.load %arg10[%c0_51, %c0_52] : memref<1x96xf32, #tpu.memory_space<vmem>>, vector<1x96xf32>
    %75 = vector.broadcast %74 : vector<1x96xf32> to vector<8x96xf32>
    %76 = arith.addf %73, %75 : vector<8x96xf32>
    %c0_53 = arith.constant 0 : index
    %c0_54 = arith.constant 0 : index
    %77 = vector.load %arg11[%c0_53, %c0_54] : memref<32x32xf32, #tpu.memory_space<vmem>>, vector<32x32xf32>
    %cst_55 = arith.constant dense<0.000000e+00> : vector<8x32xf32>
    %78 = tpu.matmul %70, %77, %cst_55 {dimension_numbers = #tpu.dot_dimension_numbers<[1], [0], [0], [1], [0, 0, 1, 1], [], []>} : vector<8x32xf32>, vector<32x32xf32>, vector<8x32xf32> -> vector<8x32xf32>
    %c0_56 = arith.constant 0 : index
    %c0_57 = arith.constant 0 : index
    %79 = vector.load %arg12[%c0_56, %c0_57] : memref<1x32xf32, #tpu.memory_space<vmem>>, vector<1x32xf32>
    %80 = vector.broadcast %79 : vector<1x32xf32> to vector<8x32xf32>
    %81 = arith.addf %78, %80 : vector<8x32xf32>
    %82 = vector.extract_strided_slice %76 {offsets = [0, 0], sizes = [8, 32], strides = [1, 1]} : vector<8x96xf32> to vector<8x32xf32>
    %83 = arith.negf %82 : vector<8x32xf32>
    %84 = math.exp %83 : vector<8x32xf32>
    %cst_58 = arith.constant 1.000000e+00 : f32
    %85 = vector.broadcast %cst_58 : f32 to vector<8x32xf32>
    %86 = arith.addf %85, %84 : vector<8x32xf32>
    %87 = arith.divf %85, %86 : vector<8x32xf32>
    %88 = vector.extract_strided_slice %76 {offsets = [0, 32], sizes = [8, 32], strides = [1, 1]} : vector<8x96xf32> to vector<8x32xf32>
    %89 = arith.negf %88 : vector<8x32xf32>
    %90 = math.exp %89 : vector<8x32xf32>
    %cst_59 = arith.constant 1.000000e+00 : f32
    %91 = vector.broadcast %cst_59 : f32 to vector<8x32xf32>
    %92 = arith.addf %91, %90 : vector<8x32xf32>
    %93 = arith.divf %91, %92 : vector<8x32xf32>
    %94 = vector.extract_strided_slice %76 {offsets = [0, 64], sizes = [8, 32], strides = [1, 1]} : vector<8x96xf32> to vector<8x32xf32>
    %cst_60 = arith.constant 1.000000e+00 : f32
    %95 = vector.broadcast %cst_60 : f32 to vector<8x32xf32>
    %96 = arith.subf %87, %95 : vector<8x32xf32>
    %97 = arith.mulf %96, %81 : vector<8x32xf32>
    %98 = arith.addf %94, %97 : vector<8x32xf32>
    %99 = math.tanh %98 : vector<8x32xf32>
    %cst_61 = arith.constant 1.000000e+00 : f32
    %100 = vector.broadcast %cst_61 : f32 to vector<8x32xf32>
    %101 = arith.subf %100, %93 : vector<8x32xf32>
    %102 = arith.mulf %101, %99 : vector<8x32xf32>
    %103 = arith.mulf %93, %70 : vector<8x32xf32>
    %104 = arith.addf %102, %103 : vector<8x32xf32>
    %c0_62 = arith.constant 0 : index
    %c0_63 = arith.constant 0 : index
    %c0_64 = arith.constant 0 : index
    %105 = vector.load %arg24[%c0_62, %c0_63, %c0_64] : memref<2x8x32xf32, #tpu.memory_space<vmem>>, vector<1x8x32xf32>
    %106 = vector.shape_cast %105 : vector<1x8x32xf32> to vector<8x32xf32>
    %107 = vector.shape_cast %104 : vector<8x32xf32> to vector<1x8x32xf32>
    tpu.vector_store %arg24[%c0_62, %c0_63, %c0_64], %107 {strides = array<i32>} : memref<2x8x32xf32, #tpu.memory_space<vmem>>, vector<1x8x32xf32>,
    %c1_65 = arith.constant 1 : index
    %c0_66 = arith.constant 0 : index
    %c0_67 = arith.constant 0 : index
    %108 = vector.load %arg4[%c1_65, %c0_66, %c0_67] : memref<2x8x32xf32, #tpu.memory_space<vmem>>, vector<1x8x32xf32>
    %109 = vector.shape_cast %108 : vector<1x8x32xf32> to vector<8x32xf32>
    %110 = tpu.concatenate %104, %109 in 1 : vector<8x32xf32>, vector<8x32xf32> -> vector<8x64xf32>
    %c0_68 = arith.constant 0 : index
    %c0_69 = arith.constant 0 : index
    %111 = vector.load %arg13[%c0_68, %c0_69] : memref<64x96xf32, #tpu.memory_space<vmem>>, vector<64x96xf32>
    %cst_70 = arith.constant dense<0.000000e+00> : vector<8x96xf32>
    %112 = tpu.matmul %110, %111, %cst_70 {dimension_numbers = #tpu.dot_dimension_numbers<[1], [0], [0], [1], [0, 0, 1, 1], [], []>} : vector<8x64xf32>, vector<64x96xf32>, vector<8x96xf32> -> vector<8x96xf32>
    %c0_71 = arith.constant 0 : index
    %c0_72 = arith.constant 0 : index
    %113 = vector.load %arg14[%c0_71, %c0_72] : memref<1x96xf32, #tpu.memory_space<vmem>>, vector<1x96xf32>
    %114 = vector.broadcast %113 : vector<1x96xf32> to vector<8x96xf32>
    %115 = arith.addf %112, %114 : vector<8x96xf32>
    %c0_73 = arith.constant 0 : index
    %c0_74 = arith.constant 0 : index
    %116 = vector.load %arg15[%c0_73, %c0_74] : memref<32x32xf32, #tpu.memory_space<vmem>>, vector<32x32xf32>
    %cst_75 = arith.constant dense<0.000000e+00> : vector<8x32xf32>
    %117 = tpu.matmul %109, %116, %cst_75 {dimension_numbers = #tpu.dot_dimension_numbers<[1], [0], [0], [1], [0, 0, 1, 1], [], []>} : vector<8x32xf32>, vector<32x32xf32>, vector<8x32xf32> -> vector<8x32xf32>
    %c0_76 = arith.constant 0 : index
    %c0_77 = arith.constant 0 : index
    %118 = vector.load %arg16[%c0_76, %c0_77] : memref<1x32xf32, #tpu.memory_space<vmem>>, vector<1x32xf32>
    %119 = vector.broadcast %118 : vector<1x32xf32> to vector<8x32xf32>
    %120 = arith.addf %117, %119 : vector<8x32xf32>
    %121 = vector.extract_strided_slice %115 {offsets = [0, 0], sizes = [8, 32], strides = [1, 1]} : vector<8x96xf32> to vector<8x32xf32>
    %122 = arith.negf %121 : vector<8x32xf32>
    %123 = math.exp %122 : vector<8x32xf32>
    %cst_78 = arith.constant 1.000000e+00 : f32
    %124 = vector.broadcast %cst_78 : f32 to vector<8x32xf32>
    %125 = arith.addf %124, %123 : vector<8x32xf32>
    %126 = arith.divf %124, %125 : vector<8x32xf32>
    %127 = vector.extract_strided_slice %115 {offsets = [0, 32], sizes = [8, 32], strides = [1, 1]} : vector<8x96xf32> to vector<8x32xf32>
    %128 = arith.negf %127 : vector<8x32xf32>
    %129 = math.exp %128 : vector<8x32xf32>
    %cst_79 = arith.constant 1.000000e+00 : f32
    %130 = vector.broadcast %cst_79 : f32 to vector<8x32xf32>
    %131 = arith.addf %130, %129 : vector<8x32xf32>
    %132 = arith.divf %130, %131 : vector<8x32xf32>
    %133 = vector.extract_strided_slice %115 {offsets = [0, 64], sizes = [8, 32], strides = [1, 1]} : vector<8x96xf32> to vector<8x32xf32>
    %cst_80 = arith.constant 1.000000e+00 : f32
    %134 = vector.broadcast %cst_80 : f32 to vector<8x32xf32>
    %135 = arith.subf %126, %134 : vector<8x32xf32>
    %136 = arith.mulf %135, %120 : vector<8x32xf32>
    %137 = arith.addf %133, %136 : vector<8x32xf32>
    %138 = math.tanh %137 : vector<8x32xf32>
    %cst_81 = arith.constant 1.000000e+00 : f32
    %139 = vector.broadcast %cst_81 : f32 to vector<8x32xf32>
    %140 = arith.subf %139, %132 : vector<8x32xf32>
    %141 = arith.mulf %140, %138 : vector<8x32xf32>
    %142 = arith.mulf %132, %109 : vector<8x32xf32>
    %143 = arith.addf %141, %142 : vector<8x32xf32>
    %c1_82 = arith.constant 1 : index
    %c0_83 = arith.constant 0 : index
    %c0_84 = arith.constant 0 : index
    %144 = vector.load %arg24[%c1_82, %c0_83, %c0_84] : memref<2x8x32xf32, #tpu.memory_space<vmem>>, vector<1x8x32xf32>
    %145 = vector.shape_cast %144 : vector<1x8x32xf32> to vector<8x32xf32>
    %146 = vector.shape_cast %143 : vector<8x32xf32> to vector<1x8x32xf32>
    tpu.vector_store %arg24[%c1_82, %c0_83, %c0_84], %146 {strides = array<i32>} : memref<2x8x32xf32, #tpu.memory_space<vmem>>, vector<1x8x32xf32>,
    %c0_85 = arith.constant 0 : index
    %c0_86 = arith.constant 0 : index
    %147 = vector.load %arg17[%c0_85, %c0_86] : memref<32x64xf32, #tpu.memory_space<vmem>>, vector<32x64xf32>
    %cst_87 = arith.constant dense<0.000000e+00> : vector<8x64xf32>
    %148 = tpu.matmul %143, %147, %cst_87 {dimension_numbers = #tpu.dot_dimension_numbers<[1], [0], [0], [1], [0, 0, 1, 1], [], []>} : vector<8x32xf32>, vector<32x64xf32>, vector<8x64xf32> -> vector<8x64xf32>
    %c0_88 = arith.constant 0 : index
    %c0_89 = arith.constant 0 : index
    %149 = vector.load %arg18[%c0_88, %c0_89] : memref<1x64xf32, #tpu.memory_space<vmem>>, vector<1x64xf32>
    %150 = vector.broadcast %149 : vector<1x64xf32> to vector<8x64xf32>
    %151 = arith.addf %148, %150 : vector<8x64xf32>
    %c0_90 = arith.constant 0 : index
    %c0_91 = arith.constant 0 : index
    %152 = vector.load %arg19[%c0_90, %c0_91] : memref<64x128xf32, #tpu.memory_space<vmem>>, vector<64x128xf32>
    %cst_92 = arith.constant dense<0.000000e+00> : vector<8x128xf32>
    %153 = tpu.matmul %151, %152, %cst_92 {dimension_numbers = #tpu.dot_dimension_numbers<[1], [0], [0], [1], [0, 0, 1, 1], [], []>} : vector<8x64xf32>, vector<64x128xf32>, vector<8x128xf32> -> vector<8x128xf32>
    %c0_93 = arith.constant 0 : index
    %c0_94 = arith.constant 0 : index
    %154 = vector.load %arg20[%c0_93, %c0_94] : memref<1x128xf32, #tpu.memory_space<vmem>>, vector<1x128xf32>
    %155 = vector.broadcast %154 : vector<1x128xf32> to vector<8x128xf32>
    %156 = arith.addf %153, %155 : vector<8x128xf32>
    %c0_95 = arith.constant 0 : index
    %c0_96 = arith.constant 0 : index
    %157 = vector.load %arg21[%c0_95, %c0_96] : memref<128x64xf32, #tpu.memory_space<vmem>>, vector<128x64xf32>
    %cst_97 = arith.constant dense<0.000000e+00> : vector<8x64xf32>
    %158 = tpu.matmul %156, %157, %cst_97 {dimension_numbers = #tpu.dot_dimension_numbers<[1], [0], [0], [1], [0, 0, 1, 1], [], []>} : vector<8x128xf32>, vector<128x64xf32>, vector<8x64xf32> -> vector<8x64xf32>
    %c0_98 = arith.constant 0 : index
    %c0_99 = arith.constant 0 : index
    %159 = vector.load %arg22[%c0_98, %c0_99] : memref<1x64xf32, #tpu.memory_space<vmem>>, vector<1x64xf32>
    %160 = vector.broadcast %159 : vector<1x64xf32> to vector<8x64xf32>
    %161 = arith.addf %158, %160 : vector<8x64xf32>
    %c0_100 = arith.constant 0 : index
    %c0_101 = arith.constant 0 : index
    %162 = vector.load %arg23[%c0_100, %c0_101] : memref<8x64xf32, #tpu.memory_space<vmem>>, vector<8x64xf32>
    tpu.vector_store %arg23[%c0_100, %c0_101], %161 {strides = array<i32>} : memref<8x64xf32, #tpu.memory_space<vmem>>, vector<8x64xf32>,
    return
  }
  func.func @transform_0(%arg0: i32, %arg1: memref<8xi32, #tpu.memory_space<smem>>) -> (i32, i32) {
    %c0_i32 = arith.constant 0 : i32
    %c0_i32_0 = arith.constant 0 : i32
    %c0_i32_1 = arith.constant 0 : i32
    return %c0_i32, %c0_i32_0 : i32, i32
  }
  func.func @transform_1(%arg0: i32, %arg1: memref<8xi32, #tpu.memory_space<smem>>) -> (i32, i32, i32) {
    %c0_i32 = arith.constant 0 : i32
    %c0_i32_0 = arith.constant 0 : i32
    %c0_i32_1 = arith.constant 0 : i32
    %c0_i32_2 = arith.constant 0 : i32
    return %c0_i32, %c0_i32_0, %c0_i32_1 : i32, i32, i32
  }
  func.func @transform_2(%arg0: i32, %arg1: memref<8xi32, #tpu.memory_space<smem>>) -> (i32, i32, i32) {
    %c0_i32 = arith.constant 0 : i32
    %c0_i32_0 = arith.constant 0 : i32
    %c0_i32_1 = arith.constant 0 : i32
    %c0_i32_2 = arith.constant 0 : i32
    return %c0_i32, %c0_i32_0, %c0_i32_1 : i32, i32, i32
  }
  func.func @transform_3(%arg0: i32, %arg1: memref<8xi32, #tpu.memory_space<smem>>) -> (i32, i32) {
    %c0_i32 = arith.constant 0 : i32
    %c0_i32_0 = arith.constant 0 : i32
    %c0_i32_1 = arith.constant 0 : i32
    return %c0_i32, %c0_i32_0 : i32, i32
  }
  func.func @transform_4(%arg0: i32, %arg1: memref<8xi32, #tpu.memory_space<smem>>) -> (i32, i32) {
    %c0_i32 = arith.constant 0 : i32
    %c0_i32_0 = arith.constant 0 : i32
    %c0_i32_1 = arith.constant 0 : i32
    return %c0_i32, %c0_i32_0 : i32, i32
  }
  func.func @transform_5(%arg0: i32, %arg1: memref<8xi32, #tpu.memory_space<smem>>) -> (i32, i32) {
    %c0_i32 = arith.constant 0 : i32
    %c0_i32_0 = arith.constant 0 : i32
    %c0_i32_1 = arith.constant 0 : i32
    return %c0_i32, %c0_i32_0 : i32, i32
  }
  func.func @transform_6(%arg0: i32, %arg1: memref<8xi32, #tpu.memory_space<smem>>) -> (i32, i32) {
    %c0_i32 = arith.constant 0 : i32
    %c0_i32_0 = arith.constant 0 : i32
    %c0_i32_1 = arith.constant 0 : i32
    return %c0_i32, %c0_i32_0 : i32, i32
  }
  func.func @transform_7(%arg0: i32, %arg1: memref<8xi32, #tpu.memory_space<smem>>) -> (i32, i32) {
    %c0_i32 = arith.constant 0 : i32
    %c0_i32_0 = arith.constant 0 : i32
    %c0_i32_1 = arith.constant 0 : i32
    return %c0_i32, %c0_i32_0 : i32, i32
  }
  func.func @transform_8(%arg0: i32, %arg1: memref<8xi32, #tpu.memory_space<smem>>) -> (i32, i32) {
    %c0_i32 = arith.constant 0 : i32
    %c0_i32_0 = arith.constant 0 : i32
    %c0_i32_1 = arith.constant 0 : i32
    return %c0_i32, %c0_i32_0 : i32, i32
  }
  func.func @transform_9(%arg0: i32, %arg1: memref<8xi32, #tpu.memory_space<smem>>) -> (i32, i32) {
    %c0_i32 = arith.constant 0 : i32
    %c0_i32_0 = arith.constant 0 : i32
    %c0_i32_1 = arith.constant 0 : i32
    return %c0_i32, %c0_i32_0 : i32, i32
  }
  func.func @transform_10(%arg0: i32, %arg1: memref<8xi32, #tpu.memory_space<smem>>) -> (i32, i32) {
    %c0_i32 = arith.constant 0 : i32
    %c0_i32_0 = arith.constant 0 : i32
    %c0_i32_1 = arith.constant 0 : i32
    return %c0_i32, %c0_i32_0 : i32, i32
  }
  func.func @transform_11(%arg0: i32, %arg1: memref<8xi32, #tpu.memory_space<smem>>) -> (i32, i32) {
    %c0_i32 = arith.constant 0 : i32
    %c0_i32_0 = arith.constant 0 : i32
    %c0_i32_1 = arith.constant 0 : i32
    return %c0_i32, %c0_i32_0 : i32, i32
  }
  func.func @transform_12(%arg0: i32, %arg1: memref<8xi32, #tpu.memory_space<smem>>) -> (i32, i32) {
    %c0_i32 = arith.constant 0 : i32
    %c0_i32_0 = arith.constant 0 : i32
    %c0_i32_1 = arith.constant 0 : i32
    return %c0_i32, %c0_i32_0 : i32, i32
  }
  func.func @transform_13(%arg0: i32, %arg1: memref<8xi32, #tpu.memory_space<smem>>) -> (i32, i32) {
    %c0_i32 = arith.constant 0 : i32
    %c0_i32_0 = arith.constant 0 : i32
    %c0_i32_1 = arith.constant 0 : i32
    return %c0_i32, %c0_i32_0 : i32, i32
  }
  func.func @transform_14(%arg0: i32, %arg1: memref<8xi32, #tpu.memory_space<smem>>) -> (i32, i32) {
    %c0_i32 = arith.constant 0 : i32
    %c0_i32_0 = arith.constant 0 : i32
    %c0_i32_1 = arith.constant 0 : i32
    return %c0_i32, %c0_i32_0 : i32, i32
  }
  func.func @transform_15(%arg0: i32, %arg1: memref<8xi32, #tpu.memory_space<smem>>) -> (i32, i32) {
    %c0_i32 = arith.constant 0 : i32
    %c0_i32_0 = arith.constant 0 : i32
    %c0_i32_1 = arith.constant 0 : i32
    return %c0_i32, %c0_i32_0 : i32, i32
  }
  func.func @transform_16(%arg0: i32, %arg1: memref<8xi32, #tpu.memory_space<smem>>) -> (i32, i32) {
    %c0_i32 = arith.constant 0 : i32
    %c0_i32_0 = arith.constant 0 : i32
    %c0_i32_1 = arith.constant 0 : i32
    return %c0_i32, %c0_i32_0 : i32, i32
  }
  func.func @transform_17(%arg0: i32, %arg1: memref<8xi32, #tpu.memory_space<smem>>) -> (i32, i32) {
    %c0_i32 = arith.constant 0 : i32
    %c0_i32_0 = arith.constant 0 : i32
    %c0_i32_1 = arith.constant 0 : i32
    return %c0_i32, %c0_i32_0 : i32, i32
  }
  func.func @transform_18(%arg0: i32, %arg1: memref<8xi32, #tpu.memory_space<smem>>) -> (i32, i32) {
    %c0_i32 = arith.constant 0 : i32
    %c0_i32_0 = arith.constant 0 : i32
    %c0_i32_1 = arith.constant 0 : i32
    return %c0_i32, %c0_i32_0 : i32, i32
  }
  func.func @transform_19(%arg0: i32, %arg1: memref<8xi32, #tpu.memory_space<smem>>) -> (i32, i32) {
    %c0_i32 = arith.constant 0 : i32
    %c0_i32_0 = arith.constant 0 : i32
    %c0_i32_1 = arith.constant 0 : i32
    return %c0_i32, %c0_i32_0 : i32, i32
  }
  func.func @transform_20(%arg0: i32, %arg1: memref<8xi32, #tpu.memory_space<smem>>) -> (i32, i32) {
    %c0_i32 = arith.constant 0 : i32
    %c0_i32_0 = arith.constant 0 : i32
    %c0_i32_1 = arith.constant 0 : i32
    return %c0_i32, %c0_i32_0 : i32, i32
  }
  func.func @transform_21(%arg0: i32, %arg1: memref<8xi32, #tpu.memory_space<smem>>) -> (i32, i32) {
    %c0_i32 = arith.constant 0 : i32
    %c0_i32_0 = arith.constant 0 : i32
    %c0_i32_1 = arith.constant 0 : i32
    return %c0_i32, %c0_i32_0 : i32, i32
  }
  func.func @transform_22(%arg0: i32, %arg1: memref<8xi32, #tpu.memory_space<smem>>) -> (i32, i32, i32) {
    %c0_i32 = arith.constant 0 : i32
    %c0_i32_0 = arith.constant 0 : i32
    %c0_i32_1 = arith.constant 0 : i32
    %c0_i32_2 = arith.constant 0 : i32
    return %c0_i32, %c0_i32_0, %c0_i32_1 : i32, i32, i32
  }
}

</mosaic_0001>

<llo_original>
// kernel: tpu_custom_call.1
$region0: #{tpu_custom_call.1}
  #allocation0 [shape = 'u32[]', space=smem, size = 0x4, offset = 0x4, fixed_abs, tag = 'smem constant byte address 0x4 - core index']
  #allocation1 [shape = 'u32[72,128]{1,0:T(1,128)}', space=vmem, size = 0x9000, scoped, tag = 'internal scratch']
  #allocation2 [shape = 'f32[8,32]{1,0:T(8,128)}', space=vmem, size = 0x1000, scoped, tag = 'scratch operand']
  #allocation3 [shape = 's32[1]{0}', space=sflag, size = 0x4, scoped, tag = 'scoped memory for tpu_custom_call.1']
  #allocation4 [shape = 'u8[512]{0}', space=smem, size = 0x200, scoped, tag = 'prefetched SMEM operand 0']
  %s0 = inlined_call_operand.vmem [shape: s32[8], index: 0, kind: input, shape index: {}]
  %s1 = inlined_call_operand.vmem [shape: f32[64,32], index: 1, kind: input, shape index: {}]
  %s2 = inlined_call_operand.vmem [shape: f32[8,8,32], index: 2, kind: input, shape index: {}]
  %s3 = inlined_call_operand.vmem [shape: f32[2,8,32], index: 3, kind: input, shape index: {}]
  %s4 = inlined_call_operand.hbm [shape: f32[32,32], index: 4, kind: input, shape index: {}]
  %s5 = inlined_call_operand.hbm [shape: f32[32,32], index: 5, kind: input, shape index: {}]
  %s6 = inlined_call_operand.vmem [shape: f32[1,32], index: 6, kind: input, shape index: {}]
  %s7 = inlined_call_operand.vmem [shape: f32[1,32], index: 7, kind: input, shape index: {}]
  %s8 = inlined_call_operand.vmem [shape: f32[96,96], index: 8, kind: input, shape index: {}]
  %s9 = inlined_call_operand.hbm [shape: f32[1,96], index: 9, kind: input, shape index: {}]
  %s10 = inlined_call_operand.hbm [shape: f32[32,32], index: 10, kind: input, shape index: {}]
  %s11 = inlined_call_operand.hbm [shape: f32[1,32], index: 11, kind: input, shape index: {}]
  %s12 = inlined_call_operand.vmem [shape: f32[64,96], index: 12, kind: input, shape index: {}]
  %s13 = inlined_call_operand.hbm [shape: f32[1,96], index: 13, kind: input, shape index: {}]
  %s14 = inlined_call_operand.hbm [shape: f32[32,32], index: 14, kind: input, shape index: {}]
  %s15 = inlined_call_operand.hbm [shape: f32[1,32], index: 15, kind: input, shape index: {}]
  %s16 = inlined_call_operand.hbm [shape: f32[32,64], index: 16, kind: input, shape index: {}]
  %s17 = inlined_call_operand.hbm [shape: f32[1,64], index: 17, kind: input, shape index: {}]
  %s18 = inlined_call_operand.hbm [shape: f32[64,128], index: 18, kind: input, shape index: {}]
  %s19 = inlined_call_operand.hbm [shape: f32[1,128], index: 19, kind: input, shape index: {}]
  %s20 = inlined_call_operand.vmem [shape: f32[128,64], index: 20, kind: input, shape index: {}]
  %s21 = inlined_call_operand.hbm [shape: f32[1,64], index: 21, kind: input, shape index: {}]
  %s22 = inlined_call_operand.hbm [shape: f32[8,64], index: 22, kind: output, shape index: {0}]
  %s23 = inlined_call_operand.hbm [shape: f32[2,8,32], index: 23, kind: output, shape index: {1}]
  %24 = xla_tuple %s22, %s23
  %s25 = sld [smem:[#allocation0]]
  $region154: #{tpu_custom_call.1} parent=0
    _
  %s27 = ssub.s32 1, %s25
  %s28 = scalar_select 0, %s27, %s25
  %s30 = sshll.u32 %s0, 4
  %s31 = int_to_ptr.vmem [resolvable:$true] %s30
  %33 = dma.vmem_to_smem %s31, 16, [#allocation4], [#allocation3]
  %35 = dma.done [#allocation3], 16
  %36 = sfence
  $region1: #{tpu_custom_call.1} parent=0
    #allocation5 [shape = 'u8[16384]{0}', space=vmem, size = 0x4000, scoped, tag = 'input window, operand 4, single buffered']
    #allocation6 [shape = 's32[1]{0}', space=sflag, size = 0x4, scoped, tag = 'scoped memory for tpu_custom_call.1']
    #allocation7 [shape = 's32[1]{0}', space=sflag, size = 0x4, scoped, tag = 'scoped memory for tpu_custom_call.1']
    #allocation8 [shape = 'u8[16384]{0}', space=vmem, size = 0x4000, scoped, tag = 'input window, operand 5, single buffered']
    #allocation9 [shape = 's32[1]{0}', space=sflag, size = 0x4, scoped, tag = 'scoped memory for tpu_custom_call.1']
    #allocation10 [shape = 'u8[512]{0}', space=vmem, size = 0x400, scoped, tag = 'input window, operand 9, single buffered']
    #allocation11 [shape = 'u8[16384]{0}', space=vmem, size = 0x4000, scoped, tag = 'input window, operand 10, single buffered']
    #allocation12 [shape = 's32[1]{0}', space=sflag, size = 0x4, scoped, tag = 'scoped memory for tpu_custom_call.1']
    #allocation13 [shape = 'u8[512]{0}', space=vmem, size = 0x400, scoped, tag = 'input window, operand 11, single buffered']
    #allocation14 [shape = 'u8[512]{0}', space=vmem, size = 0x400, scoped, tag = 'input window, operand 13, single buffered']
    #allocation15 [shape = 's32[1]{0}', space=sflag, size = 0x4, scoped, tag = 'scoped memory for tpu_custom_call.1']
    #allocation16 [shape = 'u8[16384]{0}', space=vmem, size = 0x4000, scoped, tag = 'input window, operand 14, single buffered']
    #allocation17 [shape = 'u8[512]{0}', space=vmem, size = 0x400, scoped, tag = 'input window, operand 15, single buffered']
    #allocation18 [shape = 's32[1]{0}', space=sflag, size = 0x4, scoped, tag = 'scoped memory for tpu_custom_call.1']
    #allocation19 [shape = 'u8[16384]{0}', space=vmem, size = 0x4000, scoped, tag = 'input window, operand 16, single buffered']
    #allocation20 [shape = 'u8[512]{0}', space=vmem, size = 0x400, scoped, tag = 'input window, operand 17, single buffered']
    #allocation21 [shape = 's32[1]{0}', space=sflag, size = 0x4, scoped, tag = 'scoped memory for tpu_custom_call.1']
    #allocation22 [shape = 'u8[32768]{0}', space=vmem, size = 0x8000, scoped, tag = 'input window, operand 18, single buffered']
    #allocation23 [shape = 'u8[512]{0}', space=vmem, size = 0x400, scoped, tag = 'input window, operand 19, single buffered']
    #allocation24 [shape = 's32[1]{0}', space=sflag, size = 0x4, scoped, tag = 'scoped memory for tpu_custom_call.1']
    #allocation25 [shape = 'u8[512]{0}', space=vmem, size = 0x400, scoped, tag = 'input window, operand 21, single buffered']
    #allocation26 [shape = 'u8[4096]{0}', space=vmem, size = 0x1000, scoped, tag = 'output window, operand 0, single buffered']
    #allocation27 [shape = 'u8[8192]{0}', space=vmem, size = 0x2000, scoped, tag = 'output window, operand 1, single buffered']
    #allocation28 [shape = 's32[1]{0}', space=sflag, size = 0x4, scoped, tag = 'scoped memory for tpu_custom_call.1']
    %37 = vsyncpa [#allocation6], 0
    %38 = vsyncpa [#allocation9], 0
    %39 = vsyncpa [#allocation12], 0
    %40 = vsyncpa [#allocation15], 0
    %41 = vsyncpa [#allocation18], 0
    %42 = vsyncpa [#allocation21], 0
    %43 = vsyncpa [#allocation24], 0
    %44 = vsyncpa [#allocation7], 0
    %45 = vsyncpa [#allocation28], 0
    // Predicated region
    $region2: #{tpu_custom_call.1} parent=1 // pred_check
      _
    $region3: #{tpu_custom_call.1} parent=1 // pred_check_branch
      %47 = sbr.rel (0) target = $region5
    $region4: #{tpu_custom_call.1} parent=1 // pred_region
      _
    $region5: #{tpu_custom_call.1} parent=1 // pred_fallthru
      _
    // Predicated region
    $region6: #{tpu_custom_call.1} parent=1 // pred_check
      _
    $region7: #{tpu_custom_call.1} parent=1 // pred_check_branch
      %49 = sbr.rel (0) target = $region9
    $region8: #{tpu_custom_call.1} parent=1 // pred_region
      _
    $region9: #{tpu_custom_call.1} parent=1 // pred_fallthru
      _
    // Predicated region
    $region10: #{tpu_custom_call.1} parent=1 // pred_check
      _
    $region11: #{tpu_custom_call.1} parent=1 // pred_check_branch
      %51 = sbr.rel (0) target = $region13
    $region12: #{tpu_custom_call.1} parent=1 // pred_region
      _
    $region13: #{tpu_custom_call.1} parent=1 // pred_fallthru
      _
    // Predicated region
    $region14: #{tpu_custom_call.1} parent=1 // pred_check
      _
    $region15: #{tpu_custom_call.1} parent=1 // pred_check_branch
      %53 = sbr.rel (0) target = $region17
    $region16: #{tpu_custom_call.1} parent=1 // pred_region
      %55 = vsyncadd [#allocation6], 0
      %s56 = sshll.u32 %s4, 4
      %s57 = int_to_ptr.hbm [resolvable:$true] %s56
      %s58 = sshll.u32 [#allocation5], 4
      %s59 = int_to_ptr.vmem [resolvable:$true] %s58
      %64 = dma.hbm_to_vmem [thread:$0]  %s57, 512, %s59, [#allocation6], 128, 128, 8
    $region17: #{tpu_custom_call.1} parent=1 // pred_fallthru
      _
    // Predicated region
    $region18: #{tpu_custom_call.1} parent=1 // pred_check
      _
    $region19: #{tpu_custom_call.1} parent=1 // pred_check_branch
      %66 = sbr.rel (0) target = $region21
    $region20: #{tpu_custom_call.1} parent=1 // pred_region
      %68 = vsyncadd [#allocation9], 0
      %s69 = sshll.u32 %s5, 4
      %s70 = int_to_ptr.hbm [resolvable:$true] %s69
      %s71 = sshll.u32 [#allocation8], 4
      %s72 = int_to_ptr.vmem [resolvable:$true] %s71
      %77 = dma.hbm_to_vmem [thread:$0]  %s70, 512, %s72, [#allocation9], 128, 128, 8
    $region21: #{tpu_custom_call.1} parent=1 // pred_fallthru
      _
    // Predicated region
    $region22: #{tpu_custom_call.1} parent=1 // pred_check
      _
    $region23: #{tpu_custom_call.1} parent=1 // pred_check_branch
      %79 = sbr.rel (0) target = $region25
    $region24: #{tpu_custom_call.1} parent=1 // pred_region
      _
    $region25: #{tpu_custom_call.1} parent=1 // pred_fallthru
      _
    // Predicated region
    $region26: #{tpu_custom_call.1} parent=1 // pred_check
      _
    $region27: #{tpu_custom_call.1} parent=1 // pred_check_branch
      %81 = sbr.rel (0) target = $region29
    $region28: #{tpu_custom_call.1} parent=1 // pred_region
      _
    $region29: #{tpu_custom_call.1} parent=1 // pred_fallthru
      _
    // Predicated region
    $region30: #{tpu_custom_call.1} parent=1 // pred_check
      _
    $region31: #{tpu_custom_call.1} parent=1 // pred_check_branch
      %83 = sbr.rel (0) target = $region33
    $region32: #{tpu_custom_call.1} parent=1 // pred_region
      _
    $region33: #{tpu_custom_call.1} parent=1 // pred_fallthru
      _
    // Predicated region
    $region34: #{tpu_custom_call.1} parent=1 // pred_check
      _
    $region35: #{tpu_custom_call.1} parent=1 // pred_check_branch
      %85 = sbr.rel (0) target = $region37
    $region36: #{tpu_custom_call.1} parent=1 // pred_region
      %87 = vsyncadd [#allocation9], 0
      %s89 = sshll.u32 %s9, 4
      %s90 = int_to_ptr.hbm [resolvable:$true] %s89
      %s91 = sshll.u32 [#allocation10], 4
      %s92 = int_to_ptr.vmem [resolvable:$true] %s91
      %94 = dma.hbm_to_vmem [thread:$0]  %s90, 16, %s92, [#allocation9]
    $region37: #{tpu_custom_call.1} parent=1 // pred_fallthru
      _
    // Predicated region
    $region38: #{tpu_custom_call.1} parent=1 // pred_check
      _
    $region39: #{tpu_custom_call.1} parent=1 // pred_check_branch
      %96 = sbr.rel (0) target = $region41
    $region40: #{tpu_custom_call.1} parent=1 // pred_region
      %98 = vsyncadd [#allocation12], 0
      %s99 = sshll.u32 %s10, 4
      %s100 = int_to_ptr.hbm [resolvable:$true] %s99
      %s101 = sshll.u32 [#allocation11], 4
      %s102 = int_to_ptr.vmem [resolvable:$true] %s101
      %107 = dma.hbm_to_vmem [thread:$0]  %s100, 512, %s102, [#allocation12], 128, 128, 8
    $region41: #{tpu_custom_call.1} parent=1 // pred_fallthru
      _
    // Predicated region
    $region42: #{tpu_custom_call.1} parent=1 // pred_check
      _
    $region43: #{tpu_custom_call.1} parent=1 // pred_check_branch
      %109 = sbr.rel (0) target = $region45
    $region44: #{tpu_custom_call.1} parent=1 // pred_region
      %111 = vsyncadd [#allocation12], 0
      %s113 = sshll.u32 %s11, 4
      %s114 = int_to_ptr.hbm [resolvable:$true] %s113
      %s115 = sshll.u32 [#allocation13], 4
      %s116 = int_to_ptr.vmem [resolvable:$true] %s115
      %118 = dma.hbm_to_vmem [thread:$0]  %s114, 16, %s116, [#allocation12]
    $region45: #{tpu_custom_call.1} parent=1 // pred_fallthru
      _
    // Predicated region
    $region46: #{tpu_custom_call.1} parent=1 // pred_check
      _
    $region47: #{tpu_custom_call.1} parent=1 // pred_check_branch
      %120 = sbr.rel (0) target = $region49
    $region48: #{tpu_custom_call.1} parent=1 // pred_region
      _
    $region49: #{tpu_custom_call.1} parent=1 // pred_fallthru
      _
    // Predicated region
    $region50: #{tpu_custom_call.1} parent=1 // pred_check
      _
    $region51: #{tpu_custom_call.1} parent=1 // pred_check_branch
      %122 = sbr.rel (0) target = $region53
    $region52: #{tpu_custom_call.1} parent=1 // pred_region
      %124 = vsyncadd [#allocation15], 0
      %s126 = sshll.u32 %s13, 4
      %s127 = int_to_ptr.hbm [resolvable:$true] %s126
      %s128 = sshll.u32 [#allocation14], 4
      %s129 = int_to_ptr.vmem [resolvable:$true] %s128
      %131 = dma.hbm_to_vmem [thread:$0]  %s127, 16, %s129, [#allocation15]
    $region53: #{tpu_custom_call.1} parent=1 // pred_fallthru
      _
    // Predicated region
    $region54: #{tpu_custom_call.1} parent=1 // pred_check
      _
    $region55: #{tpu_custom_call.1} parent=1 // pred_check_branch
      %133 = sbr.rel (0) target = $region57
    $region56: #{tpu_custom_call.1} parent=1 // pred_region
      %135 = vsyncadd [#allocation15], 0
      %s136 = sshll.u32 %s14, 4
      %s137 = int_to_ptr.hbm [resolvable:$true] %s136
      %s138 = sshll.u32 [#allocation16], 4
      %s139 = int_to_ptr.vmem [resolvable:$true] %s138
      %144 = dma.hbm_to_vmem [thread:$0]  %s137, 512, %s139, [#allocation15], 128, 128, 8
    $region57: #{tpu_custom_call.1} parent=1 // pred_fallthru
      _
    // Predicated region
    $region58: #{tpu_custom_call.1} parent=1 // pred_check
      _
    $region59: #{tpu_custom_call.1} parent=1 // pred_check_branch
      %146 = sbr.rel (0) target = $region61
    $region60: #{tpu_custom_call.1} parent=1 // pred_region
      %148 = vsyncadd [#allocation18], 0
      %s150 = sshll.u32 %s15, 4
      %s151 = int_to_ptr.hbm [resolvable:$true] %s150
      %s152 = sshll.u32 [#allocation17], 4
      %s153 = int_to_ptr.vmem [resolvable:$true] %s152
      %155 = dma.hbm_to_vmem [thread:$0]  %s151, 16, %s153, [#allocation18]
    $region61: #{tpu_custom_call.1} parent=1 // pred_fallthru
      _
    // Predicated region
    $region62: #{tpu_custom_call.1} parent=1 // pred_check
      _
    $region63: #{tpu_custom_call.1} parent=1 // pred_check_branch
      %157 = sbr.rel (0) target = $region65
    $region64: #{tpu_custom_call.1} parent=1 // pred_region
      %159 = vsyncadd [#allocation18], 0
      %s160 = sshll.u32 %s16, 4
      %s161 = int_to_ptr.hbm [resolvable:$true] %s160
      %s162 = sshll.u32 [#allocation19], 4
      %s163 = int_to_ptr.vmem [resolvable:$true] %s162
      %168 = dma.hbm_to_vmem [thread:$0]  %s161, 512, %s163, [#allocation18], 128, 128, 8
    $region65: #{tpu_custom_call.1} parent=1 // pred_fallthru
      _
    // Predicated region
    $region66: #{tpu_custom_call.1} parent=1 // pred_check
      _
    $region67: #{tpu_custom_call.1} parent=1 // pred_check_branch
      %170 = sbr.rel (0) target = $region69
    $region68: #{tpu_custom_call.1} parent=1 // pred_region
      %172 = vsyncadd [#allocation21], 0
      %s174 = sshll.u32 %s17, 4
      %s175 = int_to_ptr.hbm [resolvable:$true] %s174
      %s176 = sshll.u32 [#allocation20], 4
      %s177 = int_to_ptr.vmem [resolvable:$true] %s176
      %179 = dma.hbm_to_vmem [thread:$0]  %s175, 16, %s177, [#allocation21]
    $region69: #{tpu_custom_call.1} parent=1 // pred_fallthru
      _
    // Predicated region
    $region70: #{tpu_custom_call.1} parent=1 // pred_check
      _
    $region71: #{tpu_custom_call.1} parent=1 // pred_check_branch
      %181 = sbr.rel (0) target = $region73
    $region72: #{tpu_custom_call.1} parent=1 // pred_region
      %183 = vsyncadd [#allocation21], 0
      %s184 = sshll.u32 %s18, 4
      %s185 = int_to_ptr.hbm [resolvable:$true] %s184
      %s186 = sshll.u32 [#allocation22], 4
      %s187 = int_to_ptr.vmem [resolvable:$true] %s186
      %192 = dma.hbm_to_vmem [thread:$0]  %s185, 1024, %s187, [#allocation21], 128, 128, 8
    $region73: #{tpu_custom_call.1} parent=1 // pred_fallthru
      _
    // Predicated region
    $region74: #{tpu_custom_call.1} parent=1 // pred_check
      _
    $region75: #{tpu_custom_call.1} parent=1 // pred_check_branch
      %194 = sbr.rel (0) target = $region77
    $region76: #{tpu_custom_call.1} parent=1 // pred_region
      %196 = vsyncadd [#allocation24], 0
      %s198 = sshll.u32 %s19, 4
      %s199 = int_to_ptr.hbm [resolvable:$true] %s198
      %s200 = sshll.u32 [#allocation23], 4
      %s201 = int_to_ptr.vmem [resolvable:$true] %s200
      %203 = dma.hbm_to_vmem [thread:$0]  %s199, 16, %s201, [#allocation24]
    $region77: #{tpu_custom_call.1} parent=1 // pred_fallthru
      _
    // Predicated region
    $region78: #{tpu_custom_call.1} parent=1 // pred_check
      _
    $region79: #{tpu_custom_call.1} parent=1 // pred_check_branch
      %205 = sbr.rel (0) target = $region81
    $region80: #{tpu_custom_call.1} parent=1 // pred_region
      _
    $region81: #{tpu_custom_call.1} parent=1 // pred_fallthru
      _
    // Predicated region
    $region82: #{tpu_custom_call.1} parent=1 // pred_check
      _
    $region83: #{tpu_custom_call.1} parent=1 // pred_check_branch
      %207 = sbr.rel (0) target = $region85
    $region84: #{tpu_custom_call.1} parent=1 // pred_region
      %209 = vsyncadd [#allocation24], 0
      %s211 = sshll.u32 %s21, 4
      %s212 = int_to_ptr.hbm [resolvable:$true] %s211
      %s213 = sshll.u32 [#allocation25], 4
      %s214 = int_to_ptr.vmem [resolvable:$true] %s213
      %216 = dma.hbm_to_vmem [thread:$0]  %s212, 16, %s214, [#allocation24]
    $region85: #{tpu_custom_call.1} parent=1 // pred_fallthru
      _
    // Predicated region
    $region86: #{tpu_custom_call.1} parent=1 // pred_check
      _
    $region87: #{tpu_custom_call.1} parent=1 // pred_check_branch
      %218 = sbr.rel (0) target = $region89
    $region88: #{tpu_custom_call.1} parent=1 // pred_region
      %220 = dma.done [#allocation6], 512
    $region89: #{tpu_custom_call.1} parent=1 // pred_fallthru
      _
    // Predicated region
    $region90: #{tpu_custom_call.1} parent=1 // pred_check
      _
    $region91: #{tpu_custom_call.1} parent=1 // pred_check_branch
      %222 = sbr.rel (0) target = $region93
    $region92: #{tpu_custom_call.1} parent=1 // pred_region
      %224 = dma.done [#allocation9], 512
    $region93: #{tpu_custom_call.1} parent=1 // pred_fallthru
      _
    // Predicated region
    $region94: #{tpu_custom_call.1} parent=1 // pred_check
      _
    $region95: #{tpu_custom_call.1} parent=1 // pred_check_branch
      %226 = sbr.rel (0) target = $region97
    $region96: #{tpu_custom_call.1} parent=1 // pred_region
      %228 = dma.done [#allocation9], 16
    $region97: #{tpu_custom_call.1} parent=1 // pred_fallthru
      _
    // Predicated region
    $region98: #{tpu_custom_call.1} parent=1 // pred_check
      _
    $region99: #{tpu_custom_call.1} parent=1 // pred_check_branch
      %230 = sbr.rel (0) target = $region101
    $region100: #{tpu_custom_call.1} parent=1 // pred_region
      %232 = dma.done [#allocation12], 512
    $region101: #{tpu_custom_call.1} parent=1 // pred_fallthru
      _
    // Predicated region
    $region102: #{tpu_custom_call.1} parent=1 // pred_check
      _
    $region103: #{tpu_custom_call.1} parent=1 // pred_check_branch
      %234 = sbr.rel (0) target = $region105
    $region104: #{tpu_custom_call.1} parent=1 // pred_region
      %236 = dma.done [#allocation12], 16
    $region105: #{tpu_custom_call.1} parent=1 // pred_fallthru
      _
    // Predicated region
    $region106: #{tpu_custom_call.1} parent=1 // pred_check
      _
    $region107: #{tpu_custom_call.1} parent=1 // pred_check_branch
      %238 = sbr.rel (0) target = $region109
    $region108: #{tpu_custom_call.1} parent=1 // pred_region
      %240 = dma.done [#allocation15], 16
    $region109: #{tpu_custom_call.1} parent=1 // pred_fallthru
      _
    // Predicated region
    $region110: #{tpu_custom_call.1} parent=1 // pred_check
      _
    $region111: #{tpu_custom_call.1} parent=1 // pred_check_branch
      %242 = sbr.rel (0) target = $region113
    $region112: #{tpu_custom_call.1} parent=1 // pred_region
      %244 = dma.done [#allocation15], 512
    $region113: #{tpu_custom_call.1} parent=1 // pred_fallthru
      _
    // Predicated region
    $region114: #{tpu_custom_call.1} parent=1 // pred_check
      _
    $region115: #{tpu_custom_call.1} parent=1 // pred_check_branch
      %246 = sbr.rel (0) target = $region117
    $region116: #{tpu_custom_call.1} parent=1 // pred_region
      %248 = dma.done [#allocation18], 16
    $region117: #{tpu_custom_call.1} parent=1 // pred_fallthru
      _
    // Predicated region
    $region118: #{tpu_custom_call.1} parent=1 // pred_check
      _
    $region119: #{tpu_custom_call.1} parent=1 // pred_check_branch
      %250 = sbr.rel (0) target = $region121
    $region120: #{tpu_custom_call.1} parent=1 // pred_region
      %252 = dma.done [#allocation18], 512
    $region121: #{tpu_custom_call.1} parent=1 // pred_fallthru
      _
    // Predicated region
    $region122: #{tpu_custom_call.1} parent=1 // pred_check
      _
    $region123: #{tpu_custom_call.1} parent=1 // pred_check_branch
      %254 = sbr.rel (0) target = $region125
    $region124: #{tpu_custom_call.1} parent=1 // pred_region
      %256 = dma.done [#allocation21], 16
    $region125: #{tpu_custom_call.1} parent=1 // pred_fallthru
      _
    // Predicated region
    $region126: #{tpu_custom_call.1} parent=1 // pred_check
      _
    $region127: #{tpu_custom_call.1} parent=1 // pred_check_branch
      %258 = sbr.rel (0) target = $region129
    $region128: #{tpu_custom_call.1} parent=1 // pred_region
      %260 = dma.done [#allocation21], 1024
    $region129: #{tpu_custom_call.1} parent=1 // pred_fallthru
      _
    // Predicated region
    $region130: #{tpu_custom_call.1} parent=1 // pred_check
      _
    $region131: #{tpu_custom_call.1} parent=1 // pred_check_branch
      %262 = sbr.rel (0) target = $region133
    $region132: #{tpu_custom_call.1} parent=1 // pred_region
      %264 = dma.done [#allocation24], 16
    $region133: #{tpu_custom_call.1} parent=1 // pred_fallthru
      _
    // Predicated region
    $region134: #{tpu_custom_call.1} parent=1 // pred_check
      _
    $region135: #{tpu_custom_call.1} parent=1 // pred_check_branch
      %266 = sbr.rel (0) target = $region137
    $region136: #{tpu_custom_call.1} parent=1 // pred_region
      %268 = dma.done [#allocation24], 16
    $region137: #{tpu_custom_call.1} parent=1 // pred_fallthru
      _
    %s269 = sld [smem:[#allocation4]]
    %s270 = scalar_lea.vmem %s1, %s269
    %v271 = vld [vmem:[%s270] sm:$0x1]
    %vm272 = vcmask 253952
    %273 = vst.msk [vmem:[#allocation2] sm:$0x1] %vm272, %v271
    %s274 = sld [smem:[#allocation4 + $0x1]]
    %s275 = scalar_lea.vmem %s1, %s274
    %v276 = vld [vmem:[%s275] sm:$0x1]
    %277 = vst.msk [vmem:[#allocation2 + $0x1] sm:$0x1] %vm272, %v276
    %s278 = sld [smem:[#allocation4 + $0x2]]
    %s279 = scalar_lea.vmem %s1, %s278
    %v280 = vld [vmem:[%s279] sm:$0x1]
    %281 = vst.msk [vmem:[#allocation2 + $0x2] sm:$0x1] %vm272, %v280
    %s282 = sld [smem:[#allocation4 + $0x3]]
    %s283 = scalar_lea.vmem %s1, %s282
    %v284 = vld [vmem:[%s283] sm:$0x1]
    %285 = vst.msk [vmem:[#allocation2 + $0x3] sm:$0x1] %vm272, %v284
    %s286 = sld [smem:[#allocation4 + $0x4]]
    %s287 = scalar_lea.vmem %s1, %s286
    %v288 = vld [vmem:[%s287] sm:$0x1]
    %289 = vst.msk [vmem:[#allocation2 + $0x4] sm:$0x1] %vm272, %v288
    %s290 = sld [smem:[#allocation4 + $0x5]]
    %s291 = scalar_lea.vmem %s1, %s290
    %v292 = vld [vmem:[%s291] sm:$0x1]
    %293 = vst.msk [vmem:[#allocation2 + $0x5] sm:$0x1] %vm272, %v292
    %s294 = sld [smem:[#allocation4 + $0x6]]
    %s295 = scalar_lea.vmem %s1, %s294
    %v296 = vld [vmem:[%s295] sm:$0x1]
    %297 = vst.msk [vmem:[#allocation2 + $0x6] sm:$0x1] %vm272, %v296
    %s298 = sld [smem:[#allocation4 + $0x7]]
    %s299 = scalar_lea.vmem %s1, %s298
    %v300 = vld [vmem:[%s299] sm:$0x1]
    %301 = vst.msk [vmem:[#allocation2 + $0x7] sm:$0x1] %vm272, %v300
    %v302 = vld [vmem:[#allocation2] sm:$0xff]
    %v303 = vld [vmem:[%s2] sm:$0xff]
    %v304 = vld [vmem:[%s2 + $0x8] sm:$0xff]
    %v305 = vld [vmem:[%s2 + $0x10] sm:$0xff]
    %v306 = vld [vmem:[%s2 + $0x18] sm:$0xff]
    %v307 = vld [vmem:[%s2 + $0x20] sm:$0xff]
    %v308 = vld [vmem:[%s2 + $0x28] sm:$0xff]
    %v309 = vld [vmem:[%s2 + $0x30] sm:$0xff]
    %v310 = vld [vmem:[%s2 + $0x38] sm:$0xff]
    %s311 = scalar_lea.vmem %s3, 8
    %v312 = vld [vmem:[%s311] sm:$0xff]
    %v313 = vld [vmem:[#allocation5] sm:$0xff]
    %v314 = vld [vmem:[#allocation5 + $0x8] sm:$0xff]
    %v315 = vld [vmem:[#allocation5 + $0x10] sm:$0xff]
    %v316 = vld [vmem:[#allocation5 + $0x18] sm:$0xff]
    %vm317 = vcmask 261120
    %v319 = vsel %vm317, %v312, 0
    %321 = vmatpush.msra.mxu0 0.0
    %322 = vmatpush.msra.mxu0 0.0
    %323 = vmatpush.msra.mxu0 0.0
    %324 = vmatpush.msra.mxu0 0.0
    %325 = vmatpush.msra.mxu0 0.0
    %326 = vmatpush.msra.mxu0 0.0
    %327 = vmatpush.msra.mxu0 0.0
    %328 = vmatpush.msra.mxu0 0.0
    %329 = vmatpush.msra.mxu0 0.0
    %330 = vmatpush.msra.mxu0 0.0
    %331 = vmatpush.msra.mxu0 0.0
    %332 = vmatpush.msra.mxu0 0.0
    %333 = vmatpush.msra.mxu0 %v316
    %334 = vmatpush.msra.mxu0 %v315
    %335 = vmatpush.msra.mxu0 %v314
    %336 = vmatpush.msra.mxu0 %v313
    %337 = vmatmul.f32.gmra.mxu0 %v319
    %v338 = vpop.f32.mrf.mxu0
    %v339 = vadd.f32 0.0, %v338
    %340 = vdwg.mxu0
    %v341 = vld [vmem:[#allocation8] sm:$0xff]
    %v342 = vld [vmem:[#allocation8 + $0x8] sm:$0xff]
    %v343 = vld [vmem:[#allocation8 + $0x10] sm:$0xff]
    %v344 = vld [vmem:[#allocation8 + $0x18] sm:$0xff]
    %v346 = vsel %vm317, %v303, 0
    %v349 = vsel %vm317, %v304, 0
    %v352 = vsel %vm317, %v305, 0
    %v355 = vsel %vm317, %v306, 0
    %v358 = vsel %vm317, %v307, 0
    %v361 = vsel %vm317, %v308, 0
    %v364 = vsel %vm317, %v309, 0
    %v367 = vsel %vm317, %v310, 0
    %369 = vmatpush.msra.mxu0 0.0
    %370 = vmatpush.msra.mxu0 0.0
    %371 = vmatpush.msra.mxu0 0.0
    %372 = vmatpush.msra.mxu0 0.0
    %373 = vmatpush.msra.mxu0 0.0
    %374 = vmatpush.msra.mxu0 0.0
    %375 = vmatpush.msra.mxu0 0.0
    %376 = vmatpush.msra.mxu0 0.0
    %377 = vmatpush.msra.mxu0 0.0
    %378 = vmatpush.msra.mxu0 0.0
    %379 = vmatpush.msra.mxu0 0.0
    %380 = vmatpush.msra.mxu0 0.0
    %381 = vmatpush.msra.mxu0 %v344
    %382 = vmatpush.msra.mxu0 %v343
    %383 = vmatpush.msra.mxu0 %v342
    %384 = vmatpush.msra.mxu0 %v341
    %385 = vmatmul.f32.gmra.mxu0 %v346
    %v386 = vpop.f32.mrf.mxu0
    %v387 = vadd.f32 0.0, %v386
    %388 = vmatmul.f32.gmra.mxu0 %v349
    %v389 = vpop.f32.mrf.mxu0
    %v390 = vadd.f32 0.0, %v389
    %391 = vmatmul.f32.gmra.mxu0 %v352
    %v392 = vpop.f32.mrf.mxu0
    %v393 = vadd.f32 0.0, %v392
    %394 = vmatmul.f32.gmra.mxu0 %v355
    %v395 = vpop.f32.mrf.mxu0
    %v396 = vadd.f32 0.0, %v395
    %397 = vmatmul.f32.gmra.mxu0 %v358
    %v398 = vpop.f32.mrf.mxu0
    %v399 = vadd.f32 0.0, %v398
    %400 = vmatmul.f32.gmra.mxu0 %v361
    %v401 = vpop.f32.mrf.mxu0
    %v402 = vadd.f32 0.0, %v401
    %403 = vmatmul.f32.gmra.mxu0 %v364
    %v404 = vpop.f32.mrf.mxu0
    %v405 = vadd.f32 0.0, %v404
    %406 = vmatmul.f32.gmra.mxu0 %v367
    %v407 = vpop.f32.mrf.mxu0
    %v408 = vadd.f32 0.0, %v407
    %409 = vdwg.mxu0
    %v411 = vrot.slane %v339, 1
    %v412 = vrot.slane %v339, 2
    %v413 = vrot.slane %v339, 3
    %v414 = vrot.slane %v339, 4
    %v415 = vrot.slane %v339, 5
    %v416 = vrot.slane %v339, 6
    %v417 = vrot.slane %v339, 7
    %v418 = vperm.slane %v339, 0
    %v419 = vperm.slane %v411, 0
    %v420 = vperm.slane %v412, 0
    %v421 = vperm.slane %v413, 0
    %v422 = vperm.slane %v414, 0
    %v423 = vperm.slane %v415, 0
    %v424 = vperm.slane %v416, 0
    %v425 = vperm.slane %v417, 0
    %v434 = vadd.f32 %v387, %v418
    %v435 = vadd.f32 %v390, %v419
    %v436 = vadd.f32 %v393, %v420
    %v437 = vadd.f32 %v396, %v421
    %v438 = vadd.f32 %v399, %v422
    %v439 = vadd.f32 %v402, %v423
    %v440 = vadd.f32 %v405, %v424
    %v441 = vadd.f32 %v408, %v425
    %v442 = vld [vmem:[%s6] sm:$0x1]
    %v444 = vperm.slane %v442, 0
    %v446 = vadd.f32 %v434, %v444
    %v447 = vadd.f32 %v435, %v444
    %v448 = vadd.f32 %v436, %v444
    %v449 = vadd.f32 %v437, %v444
    %v450 = vadd.f32 %v438, %v444
    %v451 = vadd.f32 %v439, %v444
    %v452 = vadd.f32 %v440, %v444
    %v453 = vadd.f32 %v441, %v444
    %v454 = vtanh.pop %v446
    %v455 = vtanh.pop %v447
    %v456 = vtanh.pop %v448
    %v457 = vtanh.pop %v449
    %v458 = vtanh.pop %v450
    %v459 = vtanh.pop %v451
    %v460 = vtanh.pop %v452
    %v461 = vtanh.pop %v453
    %v462 = vld [vmem:[%s7] sm:$0x1]
    %v464 = vperm.slane %v462, 0
    %v466 = vmul.f32 %v454, %v464
    %v467 = vmul.f32 %v455, %v464
    %v468 = vmul.f32 %v456, %v464
    %v469 = vmul.f32 %v457, %v464
    %v470 = vmul.f32 %v458, %v464
    %v471 = vmul.f32 %v459, %v464
    %v472 = vmul.f32 %v460, %v464
    %v473 = vmul.f32 %v461, %v464
    %v474 = vsel %vm317, %v466, 0.0
    %475 = vadd.xlane.f32.xlu0 %v474
    %v476 = vpop.xlane.xlu0 %475
    %v477 = vsel %vm317, %v467, 0.0
    %478 = vadd.xlane.f32.xlu0 %v477
    %v479 = vpop.xlane.xlu0 %478
    %v480 = vsel %vm317, %v468, 0.0
    %481 = vadd.xlane.f32.xlu0 %v480
    %v482 = vpop.xlane.xlu0 %481
    %v483 = vsel %vm317, %v469, 0.0
    %484 = vadd.xlane.f32.xlu0 %v483
    %v485 = vpop.xlane.xlu0 %484
    %v486 = vsel %vm317, %v470, 0.0
    %487 = vadd.xlane.f32.xlu0 %v486
    %v488 = vpop.xlane.xlu0 %487
    %v489 = vsel %vm317, %v471, 0.0
    %490 = vadd.xlane.f32.xlu0 %v489
    %v491 = vpop.xlane.xlu0 %490
    %v492 = vsel %vm317, %v472, 0.0
    %493 = vadd.xlane.f32.xlu0 %v492
    %v494 = vpop.xlane.xlu0 %493
    %v495 = vsel %vm317, %v473, 0.0
    %496 = vadd.xlane.f32.xlu0 %v495
    %v497 = vpop.xlane.xlu0 %496
    %v506 = vlaneseq
    %v507 = vand.u32 %v506, 127
    %v508 = vperm.slane %v476, %v507
    %v509 = vperm.slane %v479, %v507
    %v510 = vperm.slane %v482, %v507
    %v511 = vperm.slane %v485, %v507
    %v512 = vperm.slane %v488, %v507
    %v513 = vperm.slane %v491, %v507
    %v514 = vperm.slane %v494, %v507
    %v515 = vperm.slane %v497, %v507
    %vm516 = vcmask 1041409
    %v517 = vsel %vm516, %v509, %v508
    %vm518 = vcmask 1042434
    %v519 = vsel %vm518, %v510, %v517
    %vm520 = vcmask 1043459
    %v521 = vsel %vm520, %v511, %v519
    %vm522 = vcmask 1044484
    %v523 = vsel %vm522, %v512, %v521
    %vm524 = vcmask 1045509
    %v525 = vsel %vm524, %v513, %v523
    %vm526 = vcmask 1046534
    %v527 = vsel %vm526, %v514, %v525
    %vm528 = vcmask 1047559
    %v529 = vsel %vm528, %v515, %v527
    %vm531 = vcmask 64512
    %v532 = vsel %vm531, %v529, -inf
    %533 = vmax.xlane.f32.xlu0 %v532
    %v534 = vpop.xlane.xlu0 %533
    %v536 = vperm.slane %v534, 0
    %v537 = vperm.slane %v534, 1
    %v538 = vperm.slane %v534, 2
    %v539 = vperm.slane %v534, 3
    %v540 = vperm.slane %v534, 4
    %v541 = vperm.slane %v534, 5
    %v542 = vperm.slane %v534, 6
    %v543 = vperm.slane %v534, 7
    %v552 = vsub.f32 %v476, %v536
    %v553 = vsub.f32 %v479, %v537
    %v554 = vsub.f32 %v482, %v538
    %v555 = vsub.f32 %v485, %v539
    %v556 = vsub.f32 %v488, %v540
    %v557 = vsub.f32 %v491, %v541
    %v558 = vsub.f32 %v494, %v542
    %v559 = vsub.f32 %v497, %v543
    %v560 = vmul.f32 %v552, 1.442695
    %v561 = vpow.pop %v560
    %v562 = vmul.f32 %v553, 1.442695
    %v563 = vpow.pop %v562
    %v564 = vmul.f32 %v554, 1.442695
    %v565 = vpow.pop %v564
    %v566 = vmul.f32 %v555, 1.442695
    %v567 = vpow.pop %v566
    %v568 = vmul.f32 %v556, 1.442695
    %v569 = vpow.pop %v568
    %v570 = vmul.f32 %v557, 1.442695
    %v571 = vpow.pop %v570
    %v572 = vmul.f32 %v558, 1.442695
    %v573 = vpow.pop %v572
    %v574 = vmul.f32 %v559, 1.442695
    %v575 = vpow.pop %v574
    %584 = vset.pattern.permute.xlu0 0
    %585 = vperm.xlu0 %584, %v561
    %v586 = vpop.permute.xlu0 %585
    %587 = vset.pattern.permute.xlu0 0
    %588 = vperm.xlu0 %587, %v563
    %v589 = vpop.permute.xlu0 %588
    %590 = vset.pattern.permute.xlu0 0
    %591 = vperm.xlu0 %590, %v565
    %v592 = vpop.permute.xlu0 %591
    %593 = vset.pattern.permute.xlu0 0
    %594 = vperm.xlu0 %593, %v567
    %v595 = vpop.permute.xlu0 %594
    %596 = vset.pattern.permute.xlu0 0
    %597 = vperm.xlu0 %596, %v569
    %v598 = vpop.permute.xlu0 %597
    %599 = vset.pattern.permute.xlu0 0
    %600 = vperm.xlu0 %599, %v571
    %v601 = vpop.permute.xlu0 %600
    %602 = vset.pattern.permute.xlu0 0
    %603 = vperm.xlu0 %602, %v573
    %v604 = vpop.permute.xlu0 %603
    %605 = vset.pattern.permute.xlu0 0
    %606 = vperm.xlu0 %605, %v575
    %v607 = vpop.permute.xlu0 %606
    %v608 = vperm.slane %v586, %v507
    %v609 = vperm.slane %v589, %v507
    %v610 = vperm.slane %v592, %v507
    %v611 = vperm.slane %v595, %v507
    %v612 = vperm.slane %v598, %v507
    %v613 = vperm.slane %v601, %v507
    %v614 = vperm.slane %v604, %v507
    %v615 = vperm.slane %v607, %v507
    %v616 = vsel %vm516, %v609, %v608
    %v617 = vsel %vm518, %v610, %v616
    %v618 = vsel %vm520, %v611, %v617
    %v619 = vsel %vm522, %v612, %v618
    %v620 = vsel %vm524, %v613, %v619
    %v621 = vsel %vm526, %v614, %v620
    %v622 = vsel %vm528, %v615, %v621
    %v624 = vsel %vm531, %v622, 0.0
    %625 = vadd.xlane.f32.xlu0 %v624
    %v626 = vpop.xlane.xlu0 %625
    %v628 = vperm.slane %v626, 0
    %v629 = vperm.slane %v626, 1
    %v630 = vperm.slane %v626, 2
    %v631 = vperm.slane %v626, 3
    %v632 = vperm.slane %v626, 4
    %v633 = vperm.slane %v626, 5
    %v634 = vperm.slane %v626, 6
    %v635 = vperm.slane %v626, 7
    %v644 = vrcp.pop %v628
    %v645 = vmul.f32 %v628, %v644
    %v646 = vsub.f32 1.0, %v645
    %v647 = vmul.f32 %v644, %v646
    %v648 = vadd.f32 %v644, %v647
    %vm649 = vweird.f32 %v628
    %vm650 = vweird.f32 %v644
    %vm651 = vmor %vm649, %vm650
    %v652 = vsel %vm651, %v644, %v648
    %v653 = vand.u32 2147483647, %v628
    %vm654 = vcmp.eq.f32.partialorder %v653, 8.507059e+37
    %v655 = vand.u32 %v628, 2147483648
    %v656 = vor.u32 1.1754944e-38, %v655
    %v657 = vsel %vm654, %v656, %v652
    %v658 = vmul.f32 %v561, %v657
    %v659 = vrcp.pop %v629
    %v660 = vmul.f32 %v629, %v659
    %v661 = vsub.f32 1.0, %v660
    %v662 = vmul.f32 %v659, %v661
    %v663 = vadd.f32 %v659, %v662
    %vm664 = vweird.f32 %v629
    %vm665 = vweird.f32 %v659
    %vm666 = vmor %vm664, %vm665
    %v667 = vsel %vm666, %v659, %v663
    %v668 = vand.u32 2147483647, %v629
    %vm669 = vcmp.eq.f32.partialorder %v668, 8.507059e+37
    %v670 = vand.u32 %v629, 2147483648
    %v671 = vor.u32 1.1754944e-38, %v670
    %v672 = vsel %vm669, %v671, %v667
    %v673 = vmul.f32 %v563, %v672
    %v674 = vrcp.pop %v630
    %v675 = vmul.f32 %v630, %v674
    %v676 = vsub.f32 1.0, %v675
    %v677 = vmul.f32 %v674, %v676
    %v678 = vadd.f32 %v674, %v677
    %vm679 = vweird.f32 %v630
    %vm680 = vweird.f32 %v674
    %vm681 = vmor %vm679, %vm680
    %v682 = vsel %vm681, %v674, %v678
    %v683 = vand.u32 2147483647, %v630
    %vm684 = vcmp.eq.f32.partialorder %v683, 8.507059e+37
    %v685 = vand.u32 %v630, 2147483648
    %v686 = vor.u32 1.1754944e-38, %v685
    %v687 = vsel %vm684, %v686, %v682
    %v688 = vmul.f32 %v565, %v687
    %v689 = vrcp.pop %v631
    %v690 = vmul.f32 %v631, %v689
    %v691 = vsub.f32 1.0, %v690
    %v692 = vmul.f32 %v689, %v691
    %v693 = vadd.f32 %v689, %v692
    %vm694 = vweird.f32 %v631
    %vm695 = vweird.f32 %v689
    %vm696 = vmor %vm694, %vm695
    %v697 = vsel %vm696, %v689, %v693
    %v698 = vand.u32 2147483647, %v631
    %vm699 = vcmp.eq.f32.partialorder %v698, 8.507059e+37
    %v700 = vand.u32 %v631, 2147483648
    %v701 = vor.u32 1.1754944e-38, %v700
    %v702 = vsel %vm699, %v701, %v697
    %v703 = vmul.f32 %v567, %v702
    %v704 = vrcp.pop %v632
    %v705 = vmul.f32 %v632, %v704
    %v706 = vsub.f32 1.0, %v705
    %v707 = vmul.f32 %v704, %v706
    %v708 = vadd.f32 %v704, %v707
    %vm709 = vweird.f32 %v632
    %vm710 = vweird.f32 %v704
    %vm711 = vmor %vm709, %vm710
    %v712 = vsel %vm711, %v704, %v708
    %v713 = vand.u32 2147483647, %v632
    %vm714 = vcmp.eq.f32.partialorder %v713, 8.507059e+37
    %v715 = vand.u32 %v632, 2147483648
    %v716 = vor.u32 1.1754944e-38, %v715
    %v717 = vsel %vm714, %v716, %v712
    %v718 = vmul.f32 %v569, %v717
    %v719 = vrcp.pop %v633
    %v720 = vmul.f32 %v633, %v719
    %v721 = vsub.f32 1.0, %v720
    %v722 = vmul.f32 %v719, %v721
    %v723 = vadd.f32 %v719, %v722
    %vm724 = vweird.f32 %v633
    %vm725 = vweird.f32 %v719
    %vm726 = vmor %vm724, %vm725
    %v727 = vsel %vm726, %v719, %v723
    %v728 = vand.u32 2147483647, %v633
    %vm729 = vcmp.eq.f32.partialorder %v728, 8.507059e+37
    %v730 = vand.u32 %v633, 2147483648
    %v731 = vor.u32 1.1754944e-38, %v730
    %v732 = vsel %vm729, %v731, %v727
    %v733 = vmul.f32 %v571, %v732
    %v734 = vrcp.pop %v634
    %v735 = vmul.f32 %v634, %v734
    %v736 = vsub.f32 1.0, %v735
    %v737 = vmul.f32 %v734, %v736
    %v738 = vadd.f32 %v734, %v737
    %vm739 = vweird.f32 %v634
    %vm740 = vweird.f32 %v734
    %vm741 = vmor %vm739, %vm740
    %v742 = vsel %vm741, %v734, %v738
    %v743 = vand.u32 2147483647, %v634
    %vm744 = vcmp.eq.f32.partialorder %v743, 8.507059e+37
    %v745 = vand.u32 %v634, 2147483648
    %v746 = vor.u32 1.1754944e-38, %v745
    %v747 = vsel %vm744, %v746, %v742
    %v748 = vmul.f32 %v573, %v747
    %v749 = vrcp.pop %v635
    %v750 = vmul.f32 %v635, %v749
    %v751 = vsub.f32 1.0, %v750
    %v752 = vmul.f32 %v749, %v751
    %v753 = vadd.f32 %v749, %v752
    %vm754 = vweird.f32 %v635
    %vm755 = vweird.f32 %v749
    %vm756 = vmor %vm754, %vm755
    %v757 = vsel %vm756, %v749, %v753
    %v758 = vand.u32 2147483647, %v635
    %vm759 = vcmp.eq.f32.partialorder %v758, 8.507059e+37
    %v760 = vand.u32 %v635, 2147483648
    %v761 = vor.u32 1.1754944e-38, %v760
    %v762 = vsel %vm759, %v761, %v757
    %v763 = vmul.f32 %v575, %v762
    %765 = vset.pattern.permute.xlu0 0
    %766 = vperm.xlu0 %765, %v658
    %v767 = vpop.permute.xlu0 %766
    %770 = vset.pattern.permute.xlu0 0
    %771 = vperm.xlu0 %770, %v673
    %v772 = vpop.permute.xlu0 %771
    %775 = vset.pattern.permute.xlu0 0
    %776 = vperm.xlu0 %775, %v688
    %v777 = vpop.permute.xlu0 %776
    %780 = vset.pattern.permute.xlu0 0
    %781 = vperm.xlu0 %780, %v703
    %v782 = vpop.permute.xlu0 %781
    %785 = vset.pattern.permute.xlu0 0
    %786 = vperm.xlu0 %785, %v718
    %v787 = vpop.permute.xlu0 %786
    %790 = vset.pattern.permute.xlu0 0
    %791 = vperm.xlu0 %790, %v733
    %v792 = vpop.permute.xlu0 %791
    %795 = vset.pattern.permute.xlu0 0
    %796 = vperm.xlu0 %795, %v748
    %v797 = vpop.permute.xlu0 %796
    %800 = vset.pattern.permute.xlu0 0
    %801 = vperm.xlu0 %800, %v763
    %v802 = vpop.permute.xlu0 %801
    %v804 = vmul.f32 %v767, %v303
    %v805 = vmul.f32 %v772, %v304
    %v806 = vmul.f32 %v777, %v305
    %v807 = vmul.f32 %v782, %v306
    %v808 = vmul.f32 %v787, %v307
    %v809 = vmul.f32 %v792, %v308
    %v810 = vmul.f32 %v797, %v309
    %v811 = vmul.f32 %v802, %v310
    %v812 = vsel %vm317, %v804, 0.0
    %v813 = vrot.slane %v812, 4
    %v814 = vadd.f32 %v812, %v813
    %v815 = vrot.slane %v814, 2
    %v816 = vadd.f32 %v814, %v815
    %v817 = vrot.slane %v816, 1
    %v818 = vadd.f32 %v816, %v817
    %v819 = vsel %vm317, %v805, 0.0
    %v820 = vrot.slane %v819, 4
    %v821 = vadd.f32 %v819, %v820
    %v822 = vrot.slane %v821, 2
    %v823 = vadd.f32 %v821, %v822
    %v824 = vrot.slane %v823, 1
    %v825 = vadd.f32 %v823, %v824
    %v826 = vsel %vm317, %v806, 0.0
    %v827 = vrot.slane %v826, 4
    %v828 = vadd.f32 %v826, %v827
    %v829 = vrot.slane %v828, 2
    %v830 = vadd.f32 %v828, %v829
    %v831 = vrot.slane %v830, 1
    %v832 = vadd.f32 %v830, %v831
    %v833 = vsel %vm317, %v807, 0.0
    %v834 = vrot.slane %v833, 4
    %v835 = vadd.f32 %v833, %v834
    %v836 = vrot.slane %v835, 2
    %v837 = vadd.f32 %v835, %v836
    %v838 = vrot.slane %v837, 1
    %v839 = vadd.f32 %v837, %v838
    %v840 = vsel %vm317, %v808, 0.0
    %v841 = vrot.slane %v840, 4
    %v842 = vadd.f32 %v840, %v841
    %v843 = vrot.slane %v842, 2
    %v844 = vadd.f32 %v842, %v843
    %v845 = vrot.slane %v844, 1
    %v846 = vadd.f32 %v844, %v845
    %v847 = vsel %vm317, %v809, 0.0
    %v848 = vrot.slane %v847, 4
    %v849 = vadd.f32 %v847, %v848
    %v850 = vrot.slane %v849, 2
    %v851 = vadd.f32 %v849, %v850
    %v852 = vrot.slane %v851, 1
    %v853 = vadd.f32 %v851, %v852
    %v854 = vsel %vm317, %v810, 0.0
    %v855 = vrot.slane %v854, 4
    %v856 = vadd.f32 %v854, %v855
    %v857 = vrot.slane %v856, 2
    %v858 = vadd.f32 %v856, %v857
    %v859 = vrot.slane %v858, 1
    %v860 = vadd.f32 %v858, %v859
    %v861 = vsel %vm317, %v811, 0.0
    %v862 = vrot.slane %v861, 4
    %v863 = vadd.f32 %v861, %v862
    %v864 = vrot.slane %v863, 2
    %v865 = vadd.f32 %v863, %v864
    %v866 = vrot.slane %v865, 1
    %v867 = vadd.f32 %v865, %v866
    %v876 = vsel %vm516, %v825, %v818
    %v877 = vsel %vm518, %v832, %v876
    %v878 = vsel %vm520, %v839, %v877
    %v879 = vsel %vm522, %v846, %v878
    %v880 = vsel %vm524, %v853, %v879
    %v881 = vsel %vm526, %v860, %v880
    %v882 = vsel %vm528, %v867, %v881
    %883 = vrot.lane.b32.xlu0 %v882, 32
    %v884 = vpop.permute.xlu0 %883
    %v886 = vsel %vm317, %v302, %v884
    %v887 = vld [vmem:[%s3] sm:$0xff]
    %889 = vrot.lane.b32.xlu0 %v887, 64
    %v890 = vpop.permute.xlu0 %889
    %vm892 = vcmask 523264
    %v893 = vsel %vm892, %v886, %v890
    %v894 = vld [vmem:[%s8] sm:$0xff]
    %v895 = vld [vmem:[%s8 + $0x8] sm:$0xff]
    %v896 = vld [vmem:[%s8 + $0x10] sm:$0xff]
    %v897 = vld [vmem:[%s8 + $0x18] sm:$0xff]
    %v898 = vld [vmem:[%s8 + $0x20] sm:$0xff]
    %v899 = vld [vmem:[%s8 + $0x28] sm:$0xff]
    %v900 = vld [vmem:[%s8 + $0x30] sm:$0xff]
    %v901 = vld [vmem:[%s8 + $0x38] sm:$0xff]
    %v902 = vld [vmem:[%s8 + $0x40] sm:$0xff]
    %v903 = vld [vmem:[%s8 + $0x48] sm:$0xff]
    %v904 = vld [vmem:[%s8 + $0x50] sm:$0xff]
    %v905 = vld [vmem:[%s8 + $0x58] sm:$0xff]
    %v906 = vld [vmem:[#allocation10] sm:$0x1]
    %v908 = vperm.slane %v906, 0
    %vm910 = vcmask 785408
    %v912 = vsel %vm910, %v893, 0
    %914 = vmatpush.msra.mxu0 0.0
    %915 = vmatpush.msra.mxu0 0.0
    %916 = vmatpush.msra.mxu0 0.0
    %917 = vmatpush.msra.mxu0 0.0
    %918 = vmatpush.msra.mxu0 %v905
    %919 = vmatpush.msra.mxu0 %v904
    %920 = vmatpush.msra.mxu0 %v903
    %921 = vmatpush.msra.mxu0 %v902
    %922 = vmatpush.msra.mxu0 %v901
    %923 = vmatpush.msra.mxu0 %v900
    %924 = vmatpush.msra.mxu0 %v899
    %925 = vmatpush.msra.mxu0 %v898
    %926 = vmatpush.msra.mxu0 %v897
    %927 = vmatpush.msra.mxu0 %v896
    %928 = vmatpush.msra.mxu0 %v895
    %929 = vmatpush.msra.mxu0 %v894
    %930 = vmatmul.f32.gmra.mxu0 %v912
    %v931 = vpop.f32.mrf.mxu0
    %v932 = vadd.f32 %v908, %v931
    %933 = vdwg.mxu0
    %v934 = vld [vmem:[#allocation11] sm:$0xff]
    %v935 = vld [vmem:[#allocation11 + $0x8] sm:$0xff]
    %v936 = vld [vmem:[#allocation11 + $0x10] sm:$0xff]
    %v937 = vld [vmem:[#allocation11 + $0x18] sm:$0xff]
    %v938 = vld [vmem:[#allocation13] sm:$0x1]
    %v940 = vperm.slane %v938, 0
    %v942 = vsel %vm317, %v887, 0
    %944 = vmatpush.msra.mxu0 0.0
    %945 = vmatpush.msra.mxu0 0.0
    %946 = vmatpush.msra.mxu0 0.0
    %947 = vmatpush.msra.mxu0 0.0
    %948 = vmatpush.msra.mxu0 0.0
    %949 = vmatpush.msra.mxu0 0.0
    %950 = vmatpush.msra.mxu0 0.0
    %951 = vmatpush.msra.mxu0 0.0
    %952 = vmatpush.msra.mxu0 0.0
    %953 = vmatpush.msra.mxu0 0.0
    %954 = vmatpush.msra.mxu0 0.0
    %955 = vmatpush.msra.mxu0 0.0
    %956 = vmatpush.msra.mxu0 %v937
    %957 = vmatpush.msra.mxu0 %v936
    %958 = vmatpush.msra.mxu0 %v935
    %959 = vmatpush.msra.mxu0 %v934
    %960 = vmatmul.f32.gmra.mxu0 %v942
    %v961 = vpop.f32.mrf.mxu0
    %v962 = vadd.f32 %v940, %v961
    %963 = vdwg.mxu0
    %v964 = vxor.u32 %v932, 2147483648
    %v965 = vmul.f32 %v964, 1.442695
    %v966 = vpow.pop %v965
    %v967 = vadd.f32 %v966, 1.0
    %v968 = vrcp.pop %v967
    %v969 = vmul.f32 %v967, %v968
    %v970 = vsub.f32 1.0, %v969
    %v971 = vmul.f32 %v968, %v970
    %v972 = vadd.f32 %v968, %v971
    %vm973 = vweird.f32 %v967
    %vm974 = vweird.f32 %v968
    %vm975 = vmor %vm973, %vm974
    %v976 = vsel %vm975, %v968, %v972
    %v977 = vand.u32 2147483647, %v967
    %vm978 = vcmp.eq.f32.partialorder %v977, 8.507059e+37
    %v979 = vand.u32 %v967, 2147483648
    %v980 = vor.u32 1.1754944e-38, %v979
    %v981 = vsel %vm978, %v980, %v976
    %v982 = vmul.f32 1.0, %v981
    %v983 = vsub.f32 %v982, 1.0
    %v984 = vmul.f32 %v983, %v962
    %986 = vrot.lane.b32.xlu0 %v984, 64
    %v987 = vpop.permute.xlu0 %986
    %v989 = vadd.f32 %v932, %v987
    %v990 = vtanh.pop %v989
    %v991 = vsub.f32 1.0, %v982
    %993 = vrot.lane.b32.xlu0 %v990, 96
    %v994 = vpop.permute.xlu0 %993
    %v996 = vmul.f32 %v991, %v994
    %997 = vrot.lane.b32.xlu0 %v887, 32
    %v998 = vpop.permute.xlu0 %997
    %v1000 = vmul.f32 %v982, %v998
    %v1001 = vadd.f32 %v996, %v1000
    %1003 = vrot.lane.b32.xlu0 %v1001, 96
    %v1004 = vpop.permute.xlu0 %1003
    %1006 = vst.msk [vmem:[#allocation27] sm:$0xff] %vm317, %v1004
    %v1007 = vld [vmem:[%s311] sm:$0xff]
    %1009 = vrot.lane.b32.xlu0 %v1007, 32
    %v1010 = vpop.permute.xlu0 %1009
    %v1012 = vsel %vm317, %v1004, %v1010
    %v1013 = vld [vmem:[%s12] sm:$0xff]
    %v1014 = vld [vmem:[%s12 + $0x8] sm:$0xff]
    %v1015 = vld [vmem:[%s12 + $0x10] sm:$0xff]
    %v1016 = vld [vmem:[%s12 + $0x18] sm:$0xff]
    %v1017 = vld [vmem:[%s12 + $0x20] sm:$0xff]
    %v1018 = vld [vmem:[%s12 + $0x28] sm:$0xff]
    %v1019 = vld [vmem:[%s12 + $0x30] sm:$0xff]
    %v1020 = vld [vmem:[%s12 + $0x38] sm:$0xff]
    %v1021 = vld [vmem:[#allocation14] sm:$0x1]
    %v1023 = vperm.slane %v1021, 0
    %v1026 = vsel %vm892, %v1012, 0
    %1028 = vmatpush.msra.mxu0 0.0
    %1029 = vmatpush.msra.mxu0 0.0
    %1030 = vmatpush.msra.mxu0 0.0
    %1031 = vmatpush.msra.mxu0 0.0
    %1032 = vmatpush.msra.mxu0 0.0
    %1033 = vmatpush.msra.mxu0 0.0
    %1034 = vmatpush.msra.mxu0 0.0
    %1035 = vmatpush.msra.mxu0 0.0
    %1036 = vmatpush.msra.mxu0 %v1020
    %1037 = vmatpush.msra.mxu0 %v1019
    %1038 = vmatpush.msra.mxu0 %v1018
    %1039 = vmatpush.msra.mxu0 %v1017
    %1040 = vmatpush.msra.mxu0 %v1016
    %1041 = vmatpush.msra.mxu0 %v1015
    %1042 = vmatpush.msra.mxu0 %v1014
    %1043 = vmatpush.msra.mxu0 %v1013
    %1044 = vmatmul.f32.gmra.mxu0 %v1026
    %v1045 = vpop.f32.mrf.mxu0
    %v1046 = vadd.f32 %v1023, %v1045
    %1047 = vdwg.mxu0
    %v1048 = vld [vmem:[#allocation16] sm:$0xff]
    %v1049 = vld [vmem:[#allocation16 + $0x8] sm:$0xff]
    %v1050 = vld [vmem:[#allocation16 + $0x10] sm:$0xff]
    %v1051 = vld [vmem:[#allocation16 + $0x18] sm:$0xff]
    %v1052 = vld [vmem:[#allocation17] sm:$0x1]
    %v1054 = vperm.slane %v1052, 0
    %v1056 = vsel %vm317, %v1007, 0
    %1058 = vmatpush.msra.mxu0 0.0
    %1059 = vmatpush.msra.mxu0 0.0
    %1060 = vmatpush.msra.mxu0 0.0
    %1061 = vmatpush.msra.mxu0 0.0
    %1062 = vmatpush.msra.mxu0 0.0
    %1063 = vmatpush.msra.mxu0 0.0
    %1064 = vmatpush.msra.mxu0 0.0
    %1065 = vmatpush.msra.mxu0 0.0
    %1066 = vmatpush.msra.mxu0 0.0
    %1067 = vmatpush.msra.mxu0 0.0
    %1068 = vmatpush.msra.mxu0 0.0
    %1069 = vmatpush.msra.mxu0 0.0
    %1070 = vmatpush.msra.mxu0 %v1051
    %1071 = vmatpush.msra.mxu0 %v1050
    %1072 = vmatpush.msra.mxu0 %v1049
    %1073 = vmatpush.msra.mxu0 %v1048
    %1074 = vmatmul.f32.gmra.mxu0 %v1056
    %v1075 = vpop.f32.mrf.mxu0
    %v1076 = vadd.f32 %v1054, %v1075
    %1077 = vdwg.mxu0
    %v1078 = vxor.u32 %v1046, 2147483648
    %v1079 = vmul.f32 %v1078, 1.442695
    %v1080 = vpow.pop %v1079
    %v1081 = vadd.f32 %v1080, 1.0
    %v1082 = vrcp.pop %v1081
    %v1083 = vmul.f32 %v1081, %v1082
    %v1084 = vsub.f32 1.0, %v1083
    %v1085 = vmul.f32 %v1082, %v1084
    %v1086 = vadd.f32 %v1082, %v1085
    %vm1087 = vweird.f32 %v1081
    %vm1088 = vweird.f32 %v1082
    %vm1089 = vmor %vm1087, %vm1088
    %v1090 = vsel %vm1089, %v1082, %v1086
    %v1091 = vand.u32 2147483647, %v1081
    %vm1092 = vcmp.eq.f32.partialorder %v1091, 8.507059e+37
    %v1093 = vand.u32 %v1081, 2147483648
    %v1094 = vor.u32 1.1754944e-38, %v1093
    %v1095 = vsel %vm1092, %v1094, %v1090
    %v1096 = vmul.f32 1.0, %v1095
    %v1097 = vsub.f32 %v1096, 1.0
    %v1098 = vmul.f32 %v1097, %v1076
    %1100 = vrot.lane.b32.xlu0 %v1098, 64
    %v1101 = vpop.permute.xlu0 %1100
    %v1103 = vadd.f32 %v1046, %v1101
    %v1104 = vtanh.pop %v1103
    %v1105 = vsub.f32 1.0, %v1096
    %1107 = vrot.lane.b32.xlu0 %v1104, 96
    %v1108 = vpop.permute.xlu0 %1107
    %v1110 = vmul.f32 %v1105, %v1108
    %v1111 = vmul.f32 %v1096, %v1010
    %v1112 = vadd.f32 %v1110, %v1111
    %1114 = vrot.lane.b32.xlu0 %v1112, 96
    %v1115 = vpop.permute.xlu0 %1114
    %s1117 = scalar_lea.vmem [#allocation27], 8
    %1118 = vst.msk [vmem:[%s1117] sm:$0xff] %vm317, %v1115
    %v1119 = vld [vmem:[#allocation19] sm:$0xff]
    %v1120 = vld [vmem:[#allocation19 + $0x8] sm:$0xff]
    %v1121 = vld [vmem:[#allocation19 + $0x10] sm:$0xff]
    %v1122 = vld [vmem:[#allocation19 + $0x18] sm:$0xff]
    %v1123 = vld [vmem:[#allocation20] sm:$0x1]
    %v1125 = vperm.slane %v1123, 0
    %v1127 = vsel %vm317, %v1115, 0
    %1129 = vmatpush.msra.mxu0 0.0
    %1130 = vmatpush.msra.mxu0 0.0
    %1131 = vmatpush.msra.mxu0 0.0
    %1132 = vmatpush.msra.mxu0 0.0
    %1133 = vmatpush.msra.mxu0 0.0
    %1134 = vmatpush.msra.mxu0 0.0
    %1135 = vmatpush.msra.mxu0 0.0
    %1136 = vmatpush.msra.mxu0 0.0
    %1137 = vmatpush.msra.mxu0 0.0
    %1138 = vmatpush.msra.mxu0 0.0
    %1139 = vmatpush.msra.mxu0 0.0
    %1140 = vmatpush.msra.mxu0 0.0
    %1141 = vmatpush.msra.mxu0 %v1122
    %1142 = vmatpush.msra.mxu0 %v1121
    %1143 = vmatpush.msra.mxu0 %v1120
    %1144 = vmatpush.msra.mxu0 %v1119
    %1145 = vmatmul.f32.gmra.mxu0 %v1127
    %v1146 = vpop.f32.mrf.mxu0
    %v1147 = vadd.f32 %v1125, %v1146
    %1148 = vdwg.mxu0
    %v1149 = vld [vmem:[#allocation22] sm:$0xff]
    %v1150 = vld [vmem:[#allocation22 + $0x8] sm:$0xff]
    %v1151 = vld [vmem:[#allocation22 + $0x10] sm:$0xff]
    %v1152 = vld [vmem:[#allocation22 + $0x18] sm:$0xff]
    %v1153 = vld [vmem:[#allocation22 + $0x20] sm:$0xff]
    %v1154 = vld [vmem:[#allocation22 + $0x28] sm:$0xff]
    %v1155 = vld [vmem:[#allocation22 + $0x30] sm:$0xff]
    %v1156 = vld [vmem:[#allocation22 + $0x38] sm:$0xff]
    %v1157 = vld [vmem:[#allocation23] sm:$0x1]
    %v1159 = vperm.slane %v1157, 0
    %v1162 = vsel %vm892, %v1147, 0
    %1164 = vmatpush.msra.mxu0 0.0
    %1165 = vmatpush.msra.mxu0 0.0
    %1166 = vmatpush.msra.mxu0 0.0
    %1167 = vmatpush.msra.mxu0 0.0
    %1168 = vmatpush.msra.mxu0 0.0
    %1169 = vmatpush.msra.mxu0 0.0
    %1170 = vmatpush.msra.mxu0 0.0
    %1171 = vmatpush.msra.mxu0 0.0
    %1172 = vmatpush.msra.mxu0 %v1156
    %1173 = vmatpush.msra.mxu0 %v1155
    %1174 = vmatpush.msra.mxu0 %v1154
    %1175 = vmatpush.msra.mxu0 %v1153
    %1176 = vmatpush.msra.mxu0 %v1152
    %1177 = vmatpush.msra.mxu0 %v1151
    %1178 = vmatpush.msra.mxu0 %v1150
    %1179 = vmatpush.msra.mxu0 %v1149
    %1180 = vmatmul.f32.gmra.mxu0 %v1162
    %v1181 = vpop.f32.mrf.mxu0
    %v1182 = vadd.f32 %v1159, %v1181
    %1183 = vdwg.mxu0
    %v1184 = vld [vmem:[%s20] sm:$0xff]
    %v1185 = vld [vmem:[%s20 + $0x8] sm:$0xff]
    %v1186 = vld [vmem:[%s20 + $0x10] sm:$0xff]
    %v1187 = vld [vmem:[%s20 + $0x18] sm:$0xff]
    %v1188 = vld [vmem:[%s20 + $0x20] sm:$0xff]
    %v1189 = vld [vmem:[%s20 + $0x28] sm:$0xff]
    %v1190 = vld [vmem:[%s20 + $0x30] sm:$0xff]
    %v1191 = vld [vmem:[%s20 + $0x38] sm:$0xff]
    %v1192 = vld [vmem:[%s20 + $0x40] sm:$0xff]
    %v1193 = vld [vmem:[%s20 + $0x48] sm:$0xff]
    %v1194 = vld [vmem:[%s20 + $0x50] sm:$0xff]
    %v1195 = vld [vmem:[%s20 + $0x58] sm:$0xff]
    %v1196 = vld [vmem:[%s20 + $0x60] sm:$0xff]
    %v1197 = vld [vmem:[%s20 + $0x68] sm:$0xff]
    %v1198 = vld [vmem:[%s20 + $0x70] sm:$0xff]
    %v1199 = vld [vmem:[%s20 + $0x78] sm:$0xff]
    %v1200 = vld [vmem:[#allocation25] sm:$0x1]
    %v1202 = vperm.slane %v1200, 0
    %1204 = vmatpush.msra.mxu0 %v1199
    %1205 = vmatpush.msra.mxu0 %v1198
    %1206 = vmatpush.msra.mxu0 %v1197
    %1207 = vmatpush.msra.mxu0 %v1196
    %1208 = vmatpush.msra.mxu0 %v1195
    %1209 = vmatpush.msra.mxu0 %v1194
    %1210 = vmatpush.msra.mxu0 %v1193
    %1211 = vmatpush.msra.mxu0 %v1192
    %1212 = vmatpush.msra.mxu0 %v1191
    %1213 = vmatpush.msra.mxu0 %v1190
    %1214 = vmatpush.msra.mxu0 %v1189
    %1215 = vmatpush.msra.mxu0 %v1188
    %1216 = vmatpush.msra.mxu0 %v1187
    %1217 = vmatpush.msra.mxu0 %v1186
    %1218 = vmatpush.msra.mxu0 %v1185
    %1219 = vmatpush.msra.mxu0 %v1184
    %1220 = vmatmul.f32.gmra.mxu0 %v1182
    %v1221 = vpop.f32.mrf.mxu0
    %v1222 = vadd.f32 %v1202, %v1221
    %1223 = vdwg.mxu0
    %1224 = vst.msk [vmem:[#allocation26] sm:$0xff] %vm892, %v1222
    // Predicated region
    $region138: #{tpu_custom_call.1} parent=1 // pred_check
      _
    $region139: #{tpu_custom_call.1} parent=1 // pred_check_branch
      %1226 = sbr.rel (0) target = $region141
    $region140: #{tpu_custom_call.1} parent=1 // pred_region
      %1228 = vsyncadd [#allocation7], 0
      %s1230 = sshll.u32 [#allocation26], 4
      %s1231 = int_to_ptr.vmem [resolvable:$true] %s1230
      %s1232 = sshll.u32 %s22, 4
      %s1233 = int_to_ptr.hbm [resolvable:$true] %s1232
      %1235 = dma.vmem_to_hbm [thread:$0]  %s1231, 128, %s1233, [#allocation7]
    $region141: #{tpu_custom_call.1} parent=1 // pred_fallthru
      _
    // Predicated region
    $region142: #{tpu_custom_call.1} parent=1 // pred_check
      _
    $region143: #{tpu_custom_call.1} parent=1 // pred_check_branch
      %1237 = sbr.rel (0) target = $region145
    $region144: #{tpu_custom_call.1} parent=1 // pred_region
      %1239 = vsyncadd [#allocation28], 0
      %s1240 = sshll.u32 [#allocation27], 4
      %s1241 = int_to_ptr.vmem [resolvable:$true] %s1240
      %s1242 = sshll.u32 %s23, 4
      %s1243 = int_to_ptr.hbm [resolvable:$true] %s1242
      %1248 = dma.vmem_to_hbm [thread:$0]  %s1241, 256, %s1243, [#allocation28], 128, 128, 8
    $region145: #{tpu_custom_call.1} parent=1 // pred_fallthru
      _
    // Predicated region
    $region146: #{tpu_custom_call.1} parent=1 // pred_check
      _
    $region147: #{tpu_custom_call.1} parent=1 // pred_check_branch
      %1250 = sbr.rel (0) target = $region149
    $region148: #{tpu_custom_call.1} parent=1 // pred_region
      %1252 = dma.done [#allocation7], 128
    $region149: #{tpu_custom_call.1} parent=1 // pred_fallthru
      _
    // Predicated region
    $region150: #{tpu_custom_call.1} parent=1 // pred_check
      _
    $region151: #{tpu_custom_call.1} parent=1 // pred_check_branch
      %1254 = sbr.rel (0) target = $region153
    $region152: #{tpu_custom_call.1} parent=1 // pred_region
      %1256 = dma.done [#allocation28], 256
    $region153: #{tpu_custom_call.1} parent=1 // pred_fallthru
      _
    %1257 = vsyncpa [#allocation6], 1
    %1258 = vsyncpa [#allocation9], 1
    %1259 = vsyncpa [#allocation12], 1
    %1260 = vsyncpa [#allocation15], 1
    %1261 = vsyncpa [#allocation18], 1
    %1262 = vsyncpa [#allocation21], 1
    %1263 = vsyncpa [#allocation24], 1
    %1264 = vsyncpa [#allocation7], 1
    %1265 = vsyncpa [#allocation28], 1

</llo_original>
